<compile_context>
chip_gen: v5e
topology: v5e:2x2
jax: 0.10.0
libtpu: 0.0.40
codegen_flags: <defaults>
</compile_context>

<pallas_src>
import math

import jax
import jax.numpy as jnp
from jax.experimental import pallas as pl
from jax.experimental.pallas import tpu as pltpu

# -------------------- model config (small, deterministic) --------------------
INPUT_DIM = 4        # input_features_dim
HIDDEN_DIM = 32      # hidden_state_dim
OUTPUT_DIM = 2       # output_features_dim
NUM_LAYERS = 2       # num_gru_layers
PRED_LEN = 8         # prediction_sequence_length
BATCH = 2
IN_SEQ_LEN = 8

BP = 8               # batch rows padded to one sublane group for the input GEMM
DP = 16              # input feature dim padded to one bf16 sublane tile


# ------------------------------- kernel --------------------------------------
def make_kernel(L, T, P, B, H, O, dp, bp):
    H2, H3, H4 = 2 * H, 3 * H, 4 * H

    def kernel(x_ref, w_ref, b_ref, out_ref):
        # x_ref  : (T*bp, dp)        bf16, time-major, batch rows padded to bp
        # w_ref  : (2L+2, 2H, 4H)    bf16 weight slab (see wrapper for layout)
        # b_ref  : (2L+1, 1, 4H)     f32 bias slab
        # out_ref: (P*B, O)          f32

        # ---- hoisted parameter loads / carving (once, off the recurrent chain) ----
        w_in0 = w_ref[0, :dp, :]                       # (dp, 4H)  [Wih_rz | Wih_n | 0]
        w_h_enc0 = w_ref[1, :H, :]                     # (H, 4H)   [Whh_rz | 0 | Whh_n]
        w_f_enc = [w_ref[1 + l, :, :] for l in range(1, L)]        # (2H, 4H) fused
        w_h_dec0 = w_ref[L + 1, :H, :]
        w_f_dec = [w_ref[L + 1 + l, :, :] for l in range(1, L)]
        w_proj = w_ref[2 * L + 1, :H, :]               # (H, 4H)   [proj_W^T | 0]

        def gate_bias(i):
            # Pre-broadcast + pre-slice once per layer (JAX does not CSE broadcasts).
            b = jnp.broadcast_to(b_ref[i], (B, H4))
            return b[:, :H2], b[:, H2:H3], b[:, H3:]

        b_enc = [gate_bias(l) for l in range(L)]
        b_dec = [gate_bias(L + l) for l in range(L)]
        b_proj = b_ref[2 * L][:, :O]                   # (1, O)

        def cell(g, h_prev, b):
            """g = [gi_rz+gh_rz | gi_n | gh_n] (B, 4H) f32 pre-activations."""
            b_rz, b_ihn, b_hhn = b
            # sigmoid via a single tanh EUP op: sigma(x) = 0.5*(1 + tanh(x/2))
            rz = 0.5 * (1.0 + jnp.tanh(0.5 * (g[:, :H2] + b_rz)))
            r, z = rz[:, :H], rz[:, H:]
            n = jnp.tanh(g[:, H2:H3] + b_ihn + r * (g[:, H3:] + b_hhn))
            return (1.0 - z) * n + z * h_prev

        # ---- encoder layer-0 input GEMM, batched over all T steps (off the chain) ----
        gi0_all = jnp.dot(x_ref[...], w_in0,
                          preferred_element_type=jnp.float32)      # (T*bp, 4H)

        h = [jnp.zeros((B, H), jnp.float32) for _ in range(L)]

        # ------------------------------ encoder --------------------------------
        for t in range(T):                                         # fully unrolled
            g0 = gi0_all[t * bp: t * bp + B] + jnp.dot(
                h[0].astype(jnp.bfloat16), w_h_enc0,
                preferred_element_type=jnp.float32)
            h[0] = cell(g0, h[0], b_enc[0])
            for l in range(1, L):
                xh = jnp.concatenate([h[l - 1], h[l]], axis=1).astype(jnp.bfloat16)
                gl = jnp.dot(xh, w_f_enc[l - 1], preferred_element_type=jnp.float32)
                h[l] = cell(gl, h[l], b_enc[l])

        # ------------------------------ decoder --------------------------------
        tops = []
        for t in range(P):                                         # fully unrolled
            # Layer 0: decoder input is all zeros -> no input GEMM, only biases.
            g0 = jnp.dot(h[0].astype(jnp.bfloat16), w_h_dec0,
                         preferred_element_type=jnp.float32)
            h[0] = cell(g0, h[0], b_dec[0])
            for l in range(1, L):
                xh = jnp.concatenate([h[l - 1], h[l]], axis=1).astype(jnp.bfloat16)
                gl = jnp.dot(xh, w_f_dec[l - 1], preferred_element_type=jnp.float32)
                h[l] = cell(gl, h[l], b_dec[l])
            tops.append(h[L - 1])

        # ---- deferred projection: one GEMM + one store -------------------------
        dec = jnp.concatenate(tops, axis=0).astype(jnp.bfloat16)   # (P*B, H)
        proj = jnp.dot(dec, w_proj, preferred_element_type=jnp.float32)  # (P*B, 4H)
        out_ref[...] = proj[:, :O] + b_proj

    return kernel


# ----------------------------- wrapper / glue ---------------------------------
def trajectory_predictor(input_sequence, params):
    """input_sequence: (B, T, D_in) batch_first -> returns (B, P, O)."""
    B, T, D = input_sequence.shape
    L, H, O, P = NUM_LAYERS, HIDDEN_DIM, OUTPUT_DIM, PRED_LEN
    H2, H4 = 2 * H, 4 * H
    assert D <= DP and B <= BP and DP <= 2 * H

    # ---- input slab: time-major, batch rows padded to BP, features padded to DP ----
    x = input_sequence.astype(jnp.float32)
    x_tm = jnp.transpose(x, (1, 0, 2))                              # (T, B, D)
    x_tm = jnp.pad(x_tm, ((0, 0), (0, BP - B), (0, DP - D)))        # (T, BP, DP)
    x_slab = x_tm.reshape(T * BP, DP).astype(jnp.bfloat16)

    # ---- weight slab (bf16): unified 4H-column layout ----
    def input_block(wih):            # wih: (3H, in_dim) -> (in_dim, 4H)  [rz | n | 0]
        w_t = wih.T
        return jnp.concatenate(
            [w_t[:, :H2], w_t[:, H2:], jnp.zeros((w_t.shape[0], H), jnp.float32)], axis=1)

    def hidden_block(whh):           # whh: (3H, H) -> (H, 4H)            [rz | 0 | n]
        w_t = whh.T
        return jnp.concatenate(
            [w_t[:, :H2], jnp.zeros((H, H), jnp.float32), w_t[:, H2:]], axis=1)

    def fused_block(layer):          # layers >= 1: (2H, 4H)
        wih, whh = layer[0], layer[1]
        return jnp.concatenate([input_block(wih), hidden_block(whh)], axis=0)

    def pad_rows(m):
        return jnp.pad(m, ((0, 2 * H - m.shape[0]), (0, 0)))

    w_entries = [pad_rows(input_block(params["enc_l0"][0])),        # 0: enc layer-0 input
                 pad_rows(hidden_block(params["enc_l0"][1]))]       # 1: enc layer-0 hidden
    for l in range(1, L):
        w_entries.append(fused_block(params[f"enc_l{l}"]))          # 2..L
    w_entries.append(pad_rows(hidden_block(params["dec_l0"][1])))   # L+1: dec layer-0 hidden
    for l in range(1, L):
        w_entries.append(fused_block(params[f"dec_l{l}"]))          # L+2..2L
    w_entries.append(pad_rows(jnp.concatenate(                      # 2L+1: projection
        [params["proj_w"].T, jnp.zeros((H, H4 - O), jnp.float32)], axis=1)))
    w_slab = jnp.stack(w_entries).astype(jnp.bfloat16)               # (2L+2, 2H, 4H)

    # ---- bias slab (f32): [b_r+b_r', b_z+b_z', b_ih_n, b_hh_n] per cell + proj bias ----
    def pack_bias(prefix, l):
        _, _, bih, bhh = params[f"{prefix}_l{l}"]
        return jnp.concatenate([bih[:H2] + bhh[:H2], bih[H2:], bhh[H2:]])[None, :]

    b_entries = [pack_bias("enc", l) for l in range(L)]
    b_entries += [pack_bias("dec", l) for l in range(L)]
    b_entries.append(jnp.concatenate(
        [params["proj_b"], jnp.zeros((H4 - O,), jnp.float32)])[None, :])
    b_slab = jnp.stack(b_entries)                                    # (2L+1, 1, 4H)

    kernel = make_kernel(L, T, P, B, H, O, DP, BP)
    out_flat = pl.pallas_call(
        kernel,
        out_shape=jax.ShapeDtypeStruct((P * B, O), jnp.float32),
        in_specs=[pl.BlockSpec(memory_space=pltpu.MemorySpace.VMEM)] * 3,
        out_specs=pl.BlockSpec(memory_space=pltpu.MemorySpace.VMEM),
    )(x_slab, w_slab, b_slab)
    return jnp.transpose(out_flat.reshape(P, B, O), (1, 0, 2))       # (B, P, O)


# ---------------------- deterministic parameter init --------------------------
def init_params(key):
    L, D, H, O = NUM_LAYERS, INPUT_DIM, HIDDEN_DIM, OUTPUT_DIM
    s = 1.0 / math.sqrt(H)
    params = {}
    for prefix in ("enc", "dec"):
        for l in range(L):
            in_dim = D if (prefix == "enc" and l == 0) else H
            key, k1, k2, k3, k4 = jax.random.split(key, 5)
            params[f"{prefix}_l{l}"] = (
                jax.random.uniform(k1, (3 * H, in_dim), jnp.float32, -s, s),  # weight_ih
                jax.random.uniform(k2, (3 * H, H), jnp.float32, -s, s),       # weight_hh
                jax.random.uniform(k3, (3 * H,), jnp.float32, -s, s),         # bias_ih
                jax.random.uniform(k4, (3 * H,), jnp.float32, -s, s),         # bias_hh
            )
    key, k1, k2 = jax.random.split(key, 3)
    params["proj_w"] = jax.random.uniform(k1, (O, H), jnp.float32, -s, s)
    params["proj_b"] = jax.random.uniform(k2, (O,), jnp.float32, -s, s)
    return params


# ------------------------ pure-JAX reference (checking) ------------------------
def reference(x, params):
    B, T, _ = x.shape
    L, H, P = NUM_LAYERS, HIDDEN_DIM, PRED_LEN

    def cell(x_t, h, wih, whh, bih, bhh):
        gi = x_t @ wih.T + bih
        gh = h @ whh.T + bhh
        r = jax.nn.sigmoid(gi[:, :H] + gh[:, :H])
        z = jax.nn.sigmoid(gi[:, H:2 * H] + gh[:, H:2 * H])
        n = jnp.tanh(gi[:, 2 * H:] + r * gh[:, 2 * H:])
        return (1.0 - z) * n + z * h

    h = [jnp.zeros((B, H), jnp.float32) for _ in range(L)]
    for t in range(T):
        inp = x[:, t, :]
        for l in range(L):
            h[l] = cell(inp, h[l], *params[f"enc_l{l}"])
            inp = h[l]
    outs = []
    for t in range(P):
        inp = jnp.zeros((B, H), jnp.float32)
        for l in range(L):
            h[l] = cell(inp, h[l], *params[f"dec_l{l}"])
            inp = h[l]
        outs.append(inp)
    dec = jnp.stack(outs, axis=1)                        # (B, P, H)
    return dec @ params["proj_w"].T + params["proj_b"]   # (B, P, O)


if __name__ == "__main__":
    key = jax.random.PRNGKey(0)
    key, kx, kp = jax.random.split(key, 3)
    x = jax.random.normal(kx, (BATCH, IN_SEQ_LEN, INPUT_DIM), jnp.float32)
    params = init_params(kp)

    out = trajectory_predictor(x, params)
    out = jax.block_until_ready(out)

    # Full-f32 reference for the correctness check.
    with jax.default_matmul_precision("float32"):
        ref = reference(x, params)
    ref = jax.block_until_ready(ref)

    assert out.shape == (BATCH, PRED_LEN, OUTPUT_DIM)
    # Kernel uses single-pass bf16 MXU matmuls with f32 accumulation (per perf review);
    # over the 16+8-step recurrence this drifts a few 1e-3 vs. the f32 reference, so the
    # tolerance is loosened accordingly (still catches any structural/gate-order bug).
    err = float(jnp.max(jnp.abs(out - ref)))
    assert jnp.allclose(out, ref, rtol=2e-2, atol=2e-2), f"mismatch vs reference, max |err|={err}"
    print("KERNEL_OK")
</pallas_src>

<mosaic_0001>
module attributes {stable_mosaic.version = 11 : i64} {
  func.func @kernel(%arg0: memref<64x16xbf16, #tpu.memory_space<vmem>>, %arg1: memref<6x64x128xbf16, #tpu.memory_space<vmem>>, %arg2: memref<5x1x128xf32, #tpu.memory_space<vmem>>, %arg3: memref<16x2xf32, #tpu.memory_space<vmem>>) attributes {dimension_semantics = [], scalar_prefetch = 0 : i64, scratch_operands = 0 : i64, tpu.core_type = #tpu.core_type<tc>} {
    %c0 = arith.constant 0 : index
    %c0_0 = arith.constant 0 : index
    %c0_1 = arith.constant 0 : index
    %0 = vector.load %arg1[%c0, %c0_0, %c0_1] : memref<6x64x128xbf16, #tpu.memory_space<vmem>>, vector<1x16x128xbf16>
    %1 = vector.shape_cast %0 : vector<1x16x128xbf16> to vector<16x128xbf16>
    %c1 = arith.constant 1 : index
    %c0_2 = arith.constant 0 : index
    %c0_3 = arith.constant 0 : index
    %2 = vector.load %arg1[%c1, %c0_2, %c0_3] : memref<6x64x128xbf16, #tpu.memory_space<vmem>>, vector<1x32x128xbf16>
    %3 = vector.shape_cast %2 : vector<1x32x128xbf16> to vector<32x128xbf16>
    %c2 = arith.constant 2 : index
    %c0_4 = arith.constant 0 : index
    %c0_5 = arith.constant 0 : index
    %4 = vector.load %arg1[%c2, %c0_4, %c0_5] : memref<6x64x128xbf16, #tpu.memory_space<vmem>>, vector<1x64x128xbf16>
    %5 = vector.shape_cast %4 : vector<1x64x128xbf16> to vector<64x128xbf16>
    %c3 = arith.constant 3 : index
    %c0_6 = arith.constant 0 : index
    %c0_7 = arith.constant 0 : index
    %6 = vector.load %arg1[%c3, %c0_6, %c0_7] : memref<6x64x128xbf16, #tpu.memory_space<vmem>>, vector<1x32x128xbf16>
    %7 = vector.shape_cast %6 : vector<1x32x128xbf16> to vector<32x128xbf16>
    %c4 = arith.constant 4 : index
    %c0_8 = arith.constant 0 : index
    %c0_9 = arith.constant 0 : index
    %8 = vector.load %arg1[%c4, %c0_8, %c0_9] : memref<6x64x128xbf16, #tpu.memory_space<vmem>>, vector<1x64x128xbf16>
    %9 = vector.shape_cast %8 : vector<1x64x128xbf16> to vector<64x128xbf16>
    %c5 = arith.constant 5 : index
    %c0_10 = arith.constant 0 : index
    %c0_11 = arith.constant 0 : index
    %10 = vector.load %arg1[%c5, %c0_10, %c0_11] : memref<6x64x128xbf16, #tpu.memory_space<vmem>>, vector<1x32x128xbf16>
    %11 = vector.shape_cast %10 : vector<1x32x128xbf16> to vector<32x128xbf16>
    %c0_12 = arith.constant 0 : index
    %c0_13 = arith.constant 0 : index
    %c0_14 = arith.constant 0 : index
    %12 = vector.load %arg2[%c0_12, %c0_13, %c0_14] : memref<5x1x128xf32, #tpu.memory_space<vmem>>, vector<1x1x128xf32>
    %13 = vector.shape_cast %12 : vector<1x1x128xf32> to vector<1x128xf32>
    %14 = vector.shape_cast %13 : vector<1x128xf32> to vector<1x128xf32>
    %15 = vector.broadcast %14 : vector<1x128xf32> to vector<2x128xf32>
    %16 = vector.extract_strided_slice %15 {offsets = [0, 0], sizes = [2, 64], strides = [1, 1]} : vector<2x128xf32> to vector<2x64xf32>
    %17 = vector.extract_strided_slice %15 {offsets = [0, 64], sizes = [2, 32], strides = [1, 1]} : vector<2x128xf32> to vector<2x32xf32>
    %18 = vector.extract_strided_slice %15 {offsets = [0, 96], sizes = [2, 32], strides = [1, 1]} : vector<2x128xf32> to vector<2x32xf32>
    %c1_15 = arith.constant 1 : index
    %c0_16 = arith.constant 0 : index
    %c0_17 = arith.constant 0 : index
    %19 = vector.load %arg2[%c1_15, %c0_16, %c0_17] : memref<5x1x128xf32, #tpu.memory_space<vmem>>, vector<1x1x128xf32>
    %20 = vector.shape_cast %19 : vector<1x1x128xf32> to vector<1x128xf32>
    %21 = vector.shape_cast %20 : vector<1x128xf32> to vector<1x128xf32>
    %22 = vector.broadcast %21 : vector<1x128xf32> to vector<2x128xf32>
    %23 = vector.extract_strided_slice %22 {offsets = [0, 0], sizes = [2, 64], strides = [1, 1]} : vector<2x128xf32> to vector<2x64xf32>
    %24 = vector.extract_strided_slice %22 {offsets = [0, 64], sizes = [2, 32], strides = [1, 1]} : vector<2x128xf32> to vector<2x32xf32>
    %25 = vector.extract_strided_slice %22 {offsets = [0, 96], sizes = [2, 32], strides = [1, 1]} : vector<2x128xf32> to vector<2x32xf32>
    %c2_18 = arith.constant 2 : index
    %c0_19 = arith.constant 0 : index
    %c0_20 = arith.constant 0 : index
    %26 = vector.load %arg2[%c2_18, %c0_19, %c0_20] : memref<5x1x128xf32, #tpu.memory_space<vmem>>, vector<1x1x128xf32>
    %27 = vector.shape_cast %26 : vector<1x1x128xf32> to vector<1x128xf32>
    %28 = vector.shape_cast %27 : vector<1x128xf32> to vector<1x128xf32>
    %29 = vector.broadcast %28 : vector<1x128xf32> to vector<2x128xf32>
    %30 = vector.extract_strided_slice %29 {offsets = [0, 0], sizes = [2, 64], strides = [1, 1]} : vector<2x128xf32> to vector<2x64xf32>
    %31 = vector.extract_strided_slice %29 {offsets = [0, 64], sizes = [2, 32], strides = [1, 1]} : vector<2x128xf32> to vector<2x32xf32>
    %32 = vector.extract_strided_slice %29 {offsets = [0, 96], sizes = [2, 32], strides = [1, 1]} : vector<2x128xf32> to vector<2x32xf32>
    %c3_21 = arith.constant 3 : index
    %c0_22 = arith.constant 0 : index
    %c0_23 = arith.constant 0 : index
    %33 = vector.load %arg2[%c3_21, %c0_22, %c0_23] : memref<5x1x128xf32, #tpu.memory_space<vmem>>, vector<1x1x128xf32>
    %34 = vector.shape_cast %33 : vector<1x1x128xf32> to vector<1x128xf32>
    %35 = vector.shape_cast %34 : vector<1x128xf32> to vector<1x128xf32>
    %36 = vector.broadcast %35 : vector<1x128xf32> to vector<2x128xf32>
    %37 = vector.extract_strided_slice %36 {offsets = [0, 0], sizes = [2, 64], strides = [1, 1]} : vector<2x128xf32> to vector<2x64xf32>
    %38 = vector.extract_strided_slice %36 {offsets = [0, 64], sizes = [2, 32], strides = [1, 1]} : vector<2x128xf32> to vector<2x32xf32>
    %39 = vector.extract_strided_slice %36 {offsets = [0, 96], sizes = [2, 32], strides = [1, 1]} : vector<2x128xf32> to vector<2x32xf32>
    %c4_24 = arith.constant 4 : index
    %c0_25 = arith.constant 0 : index
    %c0_26 = arith.constant 0 : index
    %40 = vector.load %arg2[%c4_24, %c0_25, %c0_26] : memref<5x1x128xf32, #tpu.memory_space<vmem>>, vector<1x1x128xf32>
    %41 = vector.shape_cast %40 : vector<1x1x128xf32> to vector<1x128xf32>
    %42 = vector.extract_strided_slice %41 {offsets = [0, 0], sizes = [1, 2], strides = [1, 1]} : vector<1x128xf32> to vector<1x2xf32>
    %c0_27 = arith.constant 0 : index
    %c0_28 = arith.constant 0 : index
    %43 = vector.load %arg0[%c0_27, %c0_28] : memref<64x16xbf16, #tpu.memory_space<vmem>>, vector<64x16xbf16>
    %cst = arith.constant dense<0.000000e+00> : vector<64x128xf32>
    %44 = tpu.matmul %43, %1, %cst {dimension_numbers = #tpu.dot_dimension_numbers<[1], [0], [0], [1], [0, 0, 1, 1], [], []>} : vector<64x16xbf16>, vector<16x128xbf16>, vector<64x128xf32> -> vector<64x128xf32>
    %cst_29 = arith.constant 0.000000e+00 : f32
    %45 = vector.broadcast %cst_29 : f32 to vector<2x32xf32>
    %cst_30 = arith.constant 0.000000e+00 : f32
    %46 = vector.broadcast %cst_30 : f32 to vector<2x32xf32>
    %47 = vector.extract_strided_slice %44 {offsets = [0, 0], sizes = [2, 128], strides = [1, 1]} : vector<64x128xf32> to vector<2x128xf32>
    %48 = arith.truncf %45 : vector<2x32xf32> to vector<2x32xbf16>
    %cst_31 = arith.constant dense<0.000000e+00> : vector<2x128xf32>
    %49 = tpu.matmul %48, %3, %cst_31 {dimension_numbers = #tpu.dot_dimension_numbers<[1], [0], [0], [1], [0, 0, 1, 1], [], []>} : vector<2x32xbf16>, vector<32x128xbf16>, vector<2x128xf32> -> vector<2x128xf32>
    %50 = arith.addf %47, %49 : vector<2x128xf32>
    %51 = vector.extract_strided_slice %50 {offsets = [0, 0], sizes = [2, 64], strides = [1, 1]} : vector<2x128xf32> to vector<2x64xf32>
    %52 = arith.addf %51, %16 : vector<2x64xf32>
    %cst_32 = arith.constant 5.000000e-01 : f32
    %53 = vector.broadcast %cst_32 : f32 to vector<2x64xf32>
    %54 = arith.mulf %53, %52 : vector<2x64xf32>
    %55 = math.tanh %54 : vector<2x64xf32>
    %cst_33 = arith.constant 1.000000e+00 : f32
    %56 = vector.broadcast %cst_33 : f32 to vector<2x64xf32>
    %57 = arith.addf %56, %55 : vector<2x64xf32>
    %cst_34 = arith.constant 5.000000e-01 : f32
    %58 = vector.broadcast %cst_34 : f32 to vector<2x64xf32>
    %59 = arith.mulf %58, %57 : vector<2x64xf32>
    %60 = vector.extract_strided_slice %59 {offsets = [0, 0], sizes = [2, 32], strides = [1, 1]} : vector<2x64xf32> to vector<2x32xf32>
    %61 = vector.extract_strided_slice %59 {offsets = [0, 32], sizes = [2, 32], strides = [1, 1]} : vector<2x64xf32> to vector<2x32xf32>
    %62 = vector.extract_strided_slice %50 {offsets = [0, 64], sizes = [2, 32], strides = [1, 1]} : vector<2x128xf32> to vector<2x32xf32>
    %63 = arith.addf %62, %17 : vector<2x32xf32>
    %64 = vector.extract_strided_slice %50 {offsets = [0, 96], sizes = [2, 32], strides = [1, 1]} : vector<2x128xf32> to vector<2x32xf32>
    %65 = arith.addf %64, %18 : vector<2x32xf32>
    %66 = arith.mulf %60, %65 : vector<2x32xf32>
    %67 = arith.addf %63, %66 : vector<2x32xf32>
    %68 = math.tanh %67 : vector<2x32xf32>
    %cst_35 = arith.constant 1.000000e+00 : f32
    %69 = vector.broadcast %cst_35 : f32 to vector<2x32xf32>
    %70 = arith.subf %69, %61 : vector<2x32xf32>
    %71 = arith.mulf %70, %68 : vector<2x32xf32>
    %72 = arith.mulf %61, %45 : vector<2x32xf32>
    %73 = arith.addf %71, %72 : vector<2x32xf32>
    %74 = tpu.concatenate %73, %46 in 1 : vector<2x32xf32>, vector<2x32xf32> -> vector<2x64xf32>
    %75 = arith.truncf %74 : vector<2x64xf32> to vector<2x64xbf16>
    %cst_36 = arith.constant dense<0.000000e+00> : vector<2x128xf32>
    %76 = tpu.matmul %75, %5, %cst_36 {dimension_numbers = #tpu.dot_dimension_numbers<[1], [0], [0], [1], [0, 0, 1, 1], [], []>} : vector<2x64xbf16>, vector<64x128xbf16>, vector<2x128xf32> -> vector<2x128xf32>
    %77 = vector.extract_strided_slice %76 {offsets = [0, 0], sizes = [2, 64], strides = [1, 1]} : vector<2x128xf32> to vector<2x64xf32>
    %78 = arith.addf %77, %23 : vector<2x64xf32>
    %cst_37 = arith.constant 5.000000e-01 : f32
    %79 = vector.broadcast %cst_37 : f32 to vector<2x64xf32>
    %80 = arith.mulf %79, %78 : vector<2x64xf32>
    %81 = math.tanh %80 : vector<2x64xf32>
    %cst_38 = arith.constant 1.000000e+00 : f32
    %82 = vector.broadcast %cst_38 : f32 to vector<2x64xf32>
    %83 = arith.addf %82, %81 : vector<2x64xf32>
    %cst_39 = arith.constant 5.000000e-01 : f32
    %84 = vector.broadcast %cst_39 : f32 to vector<2x64xf32>
    %85 = arith.mulf %84, %83 : vector<2x64xf32>
    %86 = vector.extract_strided_slice %85 {offsets = [0, 0], sizes = [2, 32], strides = [1, 1]} : vector<2x64xf32> to vector<2x32xf32>
    %87 = vector.extract_strided_slice %85 {offsets = [0, 32], sizes = [2, 32], strides = [1, 1]} : vector<2x64xf32> to vector<2x32xf32>
    %88 = vector.extract_strided_slice %76 {offsets = [0, 64], sizes = [2, 32], strides = [1, 1]} : vector<2x128xf32> to vector<2x32xf32>
    %89 = arith.addf %88, %24 : vector<2x32xf32>
    %90 = vector.extract_strided_slice %76 {offsets = [0, 96], sizes = [2, 32], strides = [1, 1]} : vector<2x128xf32> to vector<2x32xf32>
    %91 = arith.addf %90, %25 : vector<2x32xf32>
    %92 = arith.mulf %86, %91 : vector<2x32xf32>
    %93 = arith.addf %89, %92 : vector<2x32xf32>
    %94 = math.tanh %93 : vector<2x32xf32>
    %cst_40 = arith.constant 1.000000e+00 : f32
    %95 = vector.broadcast %cst_40 : f32 to vector<2x32xf32>
    %96 = arith.subf %95, %87 : vector<2x32xf32>
    %97 = arith.mulf %96, %94 : vector<2x32xf32>
    %98 = arith.mulf %87, %46 : vector<2x32xf32>
    %99 = arith.addf %97, %98 : vector<2x32xf32>
    %100 = vector.extract_strided_slice %44 {offsets = [8, 0], sizes = [2, 128], strides = [1, 1]} : vector<64x128xf32> to vector<2x128xf32>
    %101 = arith.truncf %73 : vector<2x32xf32> to vector<2x32xbf16>
    %cst_41 = arith.constant dense<0.000000e+00> : vector<2x128xf32>
    %102 = tpu.matmul %101, %3, %cst_41 {dimension_numbers = #tpu.dot_dimension_numbers<[1], [0], [0], [1], [0, 0, 1, 1], [], []>} : vector<2x32xbf16>, vector<32x128xbf16>, vector<2x128xf32> -> vector<2x128xf32>
    %103 = arith.addf %100, %102 : vector<2x128xf32>
    %104 = vector.extract_strided_slice %103 {offsets = [0, 0], sizes = [2, 64], strides = [1, 1]} : vector<2x128xf32> to vector<2x64xf32>
    %105 = arith.addf %104, %16 : vector<2x64xf32>
    %cst_42 = arith.constant 5.000000e-01 : f32
    %106 = vector.broadcast %cst_42 : f32 to vector<2x64xf32>
    %107 = arith.mulf %106, %105 : vector<2x64xf32>
    %108 = math.tanh %107 : vector<2x64xf32>
    %cst_43 = arith.constant 1.000000e+00 : f32
    %109 = vector.broadcast %cst_43 : f32 to vector<2x64xf32>
    %110 = arith.addf %109, %108 : vector<2x64xf32>
    %cst_44 = arith.constant 5.000000e-01 : f32
    %111 = vector.broadcast %cst_44 : f32 to vector<2x64xf32>
    %112 = arith.mulf %111, %110 : vector<2x64xf32>
    %113 = vector.extract_strided_slice %112 {offsets = [0, 0], sizes = [2, 32], strides = [1, 1]} : vector<2x64xf32> to vector<2x32xf32>
    %114 = vector.extract_strided_slice %112 {offsets = [0, 32], sizes = [2, 32], strides = [1, 1]} : vector<2x64xf32> to vector<2x32xf32>
    %115 = vector.extract_strided_slice %103 {offsets = [0, 64], sizes = [2, 32], strides = [1, 1]} : vector<2x128xf32> to vector<2x32xf32>
    %116 = arith.addf %115, %17 : vector<2x32xf32>
    %117 = vector.extract_strided_slice %103 {offsets = [0, 96], sizes = [2, 32], strides = [1, 1]} : vector<2x128xf32> to vector<2x32xf32>
    %118 = arith.addf %117, %18 : vector<2x32xf32>
    %119 = arith.mulf %113, %118 : vector<2x32xf32>
    %120 = arith.addf %116, %119 : vector<2x32xf32>
    %121 = math.tanh %120 : vector<2x32xf32>
    %cst_45 = arith.constant 1.000000e+00 : f32
    %122 = vector.broadcast %cst_45 : f32 to vector<2x32xf32>
    %123 = arith.subf %122, %114 : vector<2x32xf32>
    %124 = arith.mulf %123, %121 : vector<2x32xf32>
    %125 = arith.mulf %114, %73 : vector<2x32xf32>
    %126 = arith.addf %124, %125 : vector<2x32xf32>
    %127 = tpu.concatenate %126, %99 in 1 : vector<2x32xf32>, vector<2x32xf32> -> vector<2x64xf32>
    %128 = arith.truncf %127 : vector<2x64xf32> to vector<2x64xbf16>
    %cst_46 = arith.constant dense<0.000000e+00> : vector<2x128xf32>
    %129 = tpu.matmul %128, %5, %cst_46 {dimension_numbers = #tpu.dot_dimension_numbers<[1], [0], [0], [1], [0, 0, 1, 1], [], []>} : vector<2x64xbf16>, vector<64x128xbf16>, vector<2x128xf32> -> vector<2x128xf32>
    %130 = vector.extract_strided_slice %129 {offsets = [0, 0], sizes = [2, 64], strides = [1, 1]} : vector<2x128xf32> to vector<2x64xf32>
    %131 = arith.addf %130, %23 : vector<2x64xf32>
    %cst_47 = arith.constant 5.000000e-01 : f32
    %132 = vector.broadcast %cst_47 : f32 to vector<2x64xf32>
    %133 = arith.mulf %132, %131 : vector<2x64xf32>
    %134 = math.tanh %133 : vector<2x64xf32>
    %cst_48 = arith.constant 1.000000e+00 : f32
    %135 = vector.broadcast %cst_48 : f32 to vector<2x64xf32>
    %136 = arith.addf %135, %134 : vector<2x64xf32>
    %cst_49 = arith.constant 5.000000e-01 : f32
    %137 = vector.broadcast %cst_49 : f32 to vector<2x64xf32>
    %138 = arith.mulf %137, %136 : vector<2x64xf32>
    %139 = vector.extract_strided_slice %138 {offsets = [0, 0], sizes = [2, 32], strides = [1, 1]} : vector<2x64xf32> to vector<2x32xf32>
    %140 = vector.extract_strided_slice %138 {offsets = [0, 32], sizes = [2, 32], strides = [1, 1]} : vector<2x64xf32> to vector<2x32xf32>
    %141 = vector.extract_strided_slice %129 {offsets = [0, 64], sizes = [2, 32], strides = [1, 1]} : vector<2x128xf32> to vector<2x32xf32>
    %142 = arith.addf %141, %24 : vector<2x32xf32>
    %143 = vector.extract_strided_slice %129 {offsets = [0, 96], sizes = [2, 32], strides = [1, 1]} : vector<2x128xf32> to vector<2x32xf32>
    %144 = arith.addf %143, %25 : vector<2x32xf32>
    %145 = arith.mulf %139, %144 : vector<2x32xf32>
    %146 = arith.addf %142, %145 : vector<2x32xf32>
    %147 = math.tanh %146 : vector<2x32xf32>
    %cst_50 = arith.constant 1.000000e+00 : f32
    %148 = vector.broadcast %cst_50 : f32 to vector<2x32xf32>
    %149 = arith.subf %148, %140 : vector<2x32xf32>
    %150 = arith.mulf %149, %147 : vector<2x32xf32>
    %151 = arith.mulf %140, %99 : vector<2x32xf32>
    %152 = arith.addf %150, %151 : vector<2x32xf32>
    %153 = vector.extract_strided_slice %44 {offsets = [16, 0], sizes = [2, 128], strides = [1, 1]} : vector<64x128xf32> to vector<2x128xf32>
    %154 = arith.truncf %126 : vector<2x32xf32> to vector<2x32xbf16>
    %cst_51 = arith.constant dense<0.000000e+00> : vector<2x128xf32>
    %155 = tpu.matmul %154, %3, %cst_51 {dimension_numbers = #tpu.dot_dimension_numbers<[1], [0], [0], [1], [0, 0, 1, 1], [], []>} : vector<2x32xbf16>, vector<32x128xbf16>, vector<2x128xf32> -> vector<2x128xf32>
    %156 = arith.addf %153, %155 : vector<2x128xf32>
    %157 = vector.extract_strided_slice %156 {offsets = [0, 0], sizes = [2, 64], strides = [1, 1]} : vector<2x128xf32> to vector<2x64xf32>
    %158 = arith.addf %157, %16 : vector<2x64xf32>
    %cst_52 = arith.constant 5.000000e-01 : f32
    %159 = vector.broadcast %cst_52 : f32 to vector<2x64xf32>
    %160 = arith.mulf %159, %158 : vector<2x64xf32>
    %161 = math.tanh %160 : vector<2x64xf32>
    %cst_53 = arith.constant 1.000000e+00 : f32
    %162 = vector.broadcast %cst_53 : f32 to vector<2x64xf32>
    %163 = arith.addf %162, %161 : vector<2x64xf32>
    %cst_54 = arith.constant 5.000000e-01 : f32
    %164 = vector.broadcast %cst_54 : f32 to vector<2x64xf32>
    %165 = arith.mulf %164, %163 : vector<2x64xf32>
    %166 = vector.extract_strided_slice %165 {offsets = [0, 0], sizes = [2, 32], strides = [1, 1]} : vector<2x64xf32> to vector<2x32xf32>
    %167 = vector.extract_strided_slice %165 {offsets = [0, 32], sizes = [2, 32], strides = [1, 1]} : vector<2x64xf32> to vector<2x32xf32>
    %168 = vector.extract_strided_slice %156 {offsets = [0, 64], sizes = [2, 32], strides = [1, 1]} : vector<2x128xf32> to vector<2x32xf32>
    %169 = arith.addf %168, %17 : vector<2x32xf32>
    %170 = vector.extract_strided_slice %156 {offsets = [0, 96], sizes = [2, 32], strides = [1, 1]} : vector<2x128xf32> to vector<2x32xf32>
    %171 = arith.addf %170, %18 : vector<2x32xf32>
    %172 = arith.mulf %166, %171 : vector<2x32xf32>
    %173 = arith.addf %169, %172 : vector<2x32xf32>
    %174 = math.tanh %173 : vector<2x32xf32>
    %cst_55 = arith.constant 1.000000e+00 : f32
    %175 = vector.broadcast %cst_55 : f32 to vector<2x32xf32>
    %176 = arith.subf %175, %167 : vector<2x32xf32>
    %177 = arith.mulf %176, %174 : vector<2x32xf32>
    %178 = arith.mulf %167, %126 : vector<2x32xf32>
    %179 = arith.addf %177, %178 : vector<2x32xf32>
    %180 = tpu.concatenate %179, %152 in 1 : vector<2x32xf32>, vector<2x32xf32> -> vector<2x64xf32>
    %181 = arith.truncf %180 : vector<2x64xf32> to vector<2x64xbf16>
    %cst_56 = arith.constant dense<0.000000e+00> : vector<2x128xf32>
    %182 = tpu.matmul %181, %5, %cst_56 {dimension_numbers = #tpu.dot_dimension_numbers<[1], [0], [0], [1], [0, 0, 1, 1], [], []>} : vector<2x64xbf16>, vector<64x128xbf16>, vector<2x128xf32> -> vector<2x128xf32>
    %183 = vector.extract_strided_slice %182 {offsets = [0, 0], sizes = [2, 64], strides = [1, 1]} : vector<2x128xf32> to vector<2x64xf32>
    %184 = arith.addf %183, %23 : vector<2x64xf32>
    %cst_57 = arith.constant 5.000000e-01 : f32
    %185 = vector.broadcast %cst_57 : f32 to vector<2x64xf32>
    %186 = arith.mulf %185, %184 : vector<2x64xf32>
    %187 = math.tanh %186 : vector<2x64xf32>
    %cst_58 = arith.constant 1.000000e+00 : f32
    %188 = vector.broadcast %cst_58 : f32 to vector<2x64xf32>
    %189 = arith.addf %188, %187 : vector<2x64xf32>
    %cst_59 = arith.constant 5.000000e-01 : f32
    %190 = vector.broadcast %cst_59 : f32 to vector<2x64xf32>
    %191 = arith.mulf %190, %189 : vector<2x64xf32>
    %192 = vector.extract_strided_slice %191 {offsets = [0, 0], sizes = [2, 32], strides = [1, 1]} : vector<2x64xf32> to vector<2x32xf32>
    %193 = vector.extract_strided_slice %191 {offsets = [0, 32], sizes = [2, 32], strides = [1, 1]} : vector<2x64xf32> to vector<2x32xf32>
    %194 = vector.extract_strided_slice %182 {offsets = [0, 64], sizes = [2, 32], strides = [1, 1]} : vector<2x128xf32> to vector<2x32xf32>
    %195 = arith.addf %194, %24 : vector<2x32xf32>
    %196 = vector.extract_strided_slice %182 {offsets = [0, 96], sizes = [2, 32], strides = [1, 1]} : vector<2x128xf32> to vector<2x32xf32>
    %197 = arith.addf %196, %25 : vector<2x32xf32>
    %198 = arith.mulf %192, %197 : vector<2x32xf32>
    %199 = arith.addf %195, %198 : vector<2x32xf32>
    %200 = math.tanh %199 : vector<2x32xf32>
    %cst_60 = arith.constant 1.000000e+00 : f32
    %201 = vector.broadcast %cst_60 : f32 to vector<2x32xf32>
    %202 = arith.subf %201, %193 : vector<2x32xf32>
    %203 = arith.mulf %202, %200 : vector<2x32xf32>
    %204 = arith.mulf %193, %152 : vector<2x32xf32>
    %205 = arith.addf %203, %204 : vector<2x32xf32>
    %206 = vector.extract_strided_slice %44 {offsets = [24, 0], sizes = [2, 128], strides = [1, 1]} : vector<64x128xf32> to vector<2x128xf32>
    %207 = arith.truncf %179 : vector<2x32xf32> to vector<2x32xbf16>
    %cst_61 = arith.constant dense<0.000000e+00> : vector<2x128xf32>
    %208 = tpu.matmul %207, %3, %cst_61 {dimension_numbers = #tpu.dot_dimension_numbers<[1], [0], [0], [1], [0, 0, 1, 1], [], []>} : vector<2x32xbf16>, vector<32x128xbf16>, vector<2x128xf32> -> vector<2x128xf32>
    %209 = arith.addf %206, %208 : vector<2x128xf32>
    %210 = vector.extract_strided_slice %209 {offsets = [0, 0], sizes = [2, 64], strides = [1, 1]} : vector<2x128xf32> to vector<2x64xf32>
    %211 = arith.addf %210, %16 : vector<2x64xf32>
    %cst_62 = arith.constant 5.000000e-01 : f32
    %212 = vector.broadcast %cst_62 : f32 to vector<2x64xf32>
    %213 = arith.mulf %212, %211 : vector<2x64xf32>
    %214 = math.tanh %213 : vector<2x64xf32>
    %cst_63 = arith.constant 1.000000e+00 : f32
    %215 = vector.broadcast %cst_63 : f32 to vector<2x64xf32>
    %216 = arith.addf %215, %214 : vector<2x64xf32>
    %cst_64 = arith.constant 5.000000e-01 : f32
    %217 = vector.broadcast %cst_64 : f32 to vector<2x64xf32>
    %218 = arith.mulf %217, %216 : vector<2x64xf32>
    %219 = vector.extract_strided_slice %218 {offsets = [0, 0], sizes = [2, 32], strides = [1, 1]} : vector<2x64xf32> to vector<2x32xf32>
    %220 = vector.extract_strided_slice %218 {offsets = [0, 32], sizes = [2, 32], strides = [1, 1]} : vector<2x64xf32> to vector<2x32xf32>
    %221 = vector.extract_strided_slice %209 {offsets = [0, 64], sizes = [2, 32], strides = [1, 1]} : vector<2x128xf32> to vector<2x32xf32>
    %222 = arith.addf %221, %17 : vector<2x32xf32>
    %223 = vector.extract_strided_slice %209 {offsets = [0, 96], sizes = [2, 32], strides = [1, 1]} : vector<2x128xf32> to vector<2x32xf32>
    %224 = arith.addf %223, %18 : vector<2x32xf32>
    %225 = arith.mulf %219, %224 : vector<2x32xf32>
    %226 = arith.addf %222, %225 : vector<2x32xf32>
    %227 = math.tanh %226 : vector<2x32xf32>
    %cst_65 = arith.constant 1.000000e+00 : f32
    %228 = vector.broadcast %cst_65 : f32 to vector<2x32xf32>
    %229 = arith.subf %228, %220 : vector<2x32xf32>
    %230 = arith.mulf %229, %227 : vector<2x32xf32>
    %231 = arith.mulf %220, %179 : vector<2x32xf32>
    %232 = arith.addf %230, %231 : vector<2x32xf32>
    %233 = tpu.concatenate %232, %205 in 1 : vector<2x32xf32>, vector<2x32xf32> -> vector<2x64xf32>
    %234 = arith.truncf %233 : vector<2x64xf32> to vector<2x64xbf16>
    %cst_66 = arith.constant dense<0.000000e+00> : vector<2x128xf32>
    %235 = tpu.matmul %234, %5, %cst_66 {dimension_numbers = #tpu.dot_dimension_numbers<[1], [0], [0], [1], [0, 0, 1, 1], [], []>} : vector<2x64xbf16>, vector<64x128xbf16>, vector<2x128xf32> -> vector<2x128xf32>
    %236 = vector.extract_strided_slice %235 {offsets = [0, 0], sizes = [2, 64], strides = [1, 1]} : vector<2x128xf32> to vector<2x64xf32>
    %237 = arith.addf %236, %23 : vector<2x64xf32>
    %cst_67 = arith.constant 5.000000e-01 : f32
    %238 = vector.broadcast %cst_67 : f32 to vector<2x64xf32>
    %239 = arith.mulf %238, %237 : vector<2x64xf32>
    %240 = math.tanh %239 : vector<2x64xf32>
    %cst_68 = arith.constant 1.000000e+00 : f32
    %241 = vector.broadcast %cst_68 : f32 to vector<2x64xf32>
    %242 = arith.addf %241, %240 : vector<2x64xf32>
    %cst_69 = arith.constant 5.000000e-01 : f32
    %243 = vector.broadcast %cst_69 : f32 to vector<2x64xf32>
    %244 = arith.mulf %243, %242 : vector<2x64xf32>
    %245 = vector.extract_strided_slice %244 {offsets = [0, 0], sizes = [2, 32], strides = [1, 1]} : vector<2x64xf32> to vector<2x32xf32>
    %246 = vector.extract_strided_slice %244 {offsets = [0, 32], sizes = [2, 32], strides = [1, 1]} : vector<2x64xf32> to vector<2x32xf32>
    %247 = vector.extract_strided_slice %235 {offsets = [0, 64], sizes = [2, 32], strides = [1, 1]} : vector<2x128xf32> to vector<2x32xf32>
    %248 = arith.addf %247, %24 : vector<2x32xf32>
    %249 = vector.extract_strided_slice %235 {offsets = [0, 96], sizes = [2, 32], strides = [1, 1]} : vector<2x128xf32> to vector<2x32xf32>
    %250 = arith.addf %249, %25 : vector<2x32xf32>
    %251 = arith.mulf %245, %250 : vector<2x32xf32>
    %252 = arith.addf %248, %251 : vector<2x32xf32>
    %253 = math.tanh %252 : vector<2x32xf32>
    %cst_70 = arith.constant 1.000000e+00 : f32
    %254 = vector.broadcast %cst_70 : f32 to vector<2x32xf32>
    %255 = arith.subf %254, %246 : vector<2x32xf32>
    %256 = arith.mulf %255, %253 : vector<2x32xf32>
    %257 = arith.mulf %246, %205 : vector<2x32xf32>
    %258 = arith.addf %256, %257 : vector<2x32xf32>
    %259 = vector.extract_strided_slice %44 {offsets = [32, 0], sizes = [2, 128], strides = [1, 1]} : vector<64x128xf32> to vector<2x128xf32>
    %260 = arith.truncf %232 : vector<2x32xf32> to vector<2x32xbf16>
    %cst_71 = arith.constant dense<0.000000e+00> : vector<2x128xf32>
    %261 = tpu.matmul %260, %3, %cst_71 {dimension_numbers = #tpu.dot_dimension_numbers<[1], [0], [0], [1], [0, 0, 1, 1], [], []>} : vector<2x32xbf16>, vector<32x128xbf16>, vector<2x128xf32> -> vector<2x128xf32>
    %262 = arith.addf %259, %261 : vector<2x128xf32>
    %263 = vector.extract_strided_slice %262 {offsets = [0, 0], sizes = [2, 64], strides = [1, 1]} : vector<2x128xf32> to vector<2x64xf32>
    %264 = arith.addf %263, %16 : vector<2x64xf32>
    %cst_72 = arith.constant 5.000000e-01 : f32
    %265 = vector.broadcast %cst_72 : f32 to vector<2x64xf32>
    %266 = arith.mulf %265, %264 : vector<2x64xf32>
    %267 = math.tanh %266 : vector<2x64xf32>
    %cst_73 = arith.constant 1.000000e+00 : f32
    %268 = vector.broadcast %cst_73 : f32 to vector<2x64xf32>
    %269 = arith.addf %268, %267 : vector<2x64xf32>
    %cst_74 = arith.constant 5.000000e-01 : f32
    %270 = vector.broadcast %cst_74 : f32 to vector<2x64xf32>
    %271 = arith.mulf %270, %269 : vector<2x64xf32>
    %272 = vector.extract_strided_slice %271 {offsets = [0, 0], sizes = [2, 32], strides = [1, 1]} : vector<2x64xf32> to vector<2x32xf32>
    %273 = vector.extract_strided_slice %271 {offsets = [0, 32], sizes = [2, 32], strides = [1, 1]} : vector<2x64xf32> to vector<2x32xf32>
    %274 = vector.extract_strided_slice %262 {offsets = [0, 64], sizes = [2, 32], strides = [1, 1]} : vector<2x128xf32> to vector<2x32xf32>
    %275 = arith.addf %274, %17 : vector<2x32xf32>
    %276 = vector.extract_strided_slice %262 {offsets = [0, 96], sizes = [2, 32], strides = [1, 1]} : vector<2x128xf32> to vector<2x32xf32>
    %277 = arith.addf %276, %18 : vector<2x32xf32>
    %278 = arith.mulf %272, %277 : vector<2x32xf32>
    %279 = arith.addf %275, %278 : vector<2x32xf32>
    %280 = math.tanh %279 : vector<2x32xf32>
    %cst_75 = arith.constant 1.000000e+00 : f32
    %281 = vector.broadcast %cst_75 : f32 to vector<2x32xf32>
    %282 = arith.subf %281, %273 : vector<2x32xf32>
    %283 = arith.mulf %282, %280 : vector<2x32xf32>
    %284 = arith.mulf %273, %232 : vector<2x32xf32>
    %285 = arith.addf %283, %284 : vector<2x32xf32>
    %286 = tpu.concatenate %285, %258 in 1 : vector<2x32xf32>, vector<2x32xf32> -> vector<2x64xf32>
    %287 = arith.truncf %286 : vector<2x64xf32> to vector<2x64xbf16>
    %cst_76 = arith.constant dense<0.000000e+00> : vector<2x128xf32>
    %288 = tpu.matmul %287, %5, %cst_76 {dimension_numbers = #tpu.dot_dimension_numbers<[1], [0], [0], [1], [0, 0, 1, 1], [], []>} : vector<2x64xbf16>, vector<64x128xbf16>, vector<2x128xf32> -> vector<2x128xf32>
    %289 = vector.extract_strided_slice %288 {offsets = [0, 0], sizes = [2, 64], strides = [1, 1]} : vector<2x128xf32> to vector<2x64xf32>
    %290 = arith.addf %289, %23 : vector<2x64xf32>
    %cst_77 = arith.constant 5.000000e-01 : f32
    %291 = vector.broadcast %cst_77 : f32 to vector<2x64xf32>
    %292 = arith.mulf %291, %290 : vector<2x64xf32>
    %293 = math.tanh %292 : vector<2x64xf32>
    %cst_78 = arith.constant 1.000000e+00 : f32
    %294 = vector.broadcast %cst_78 : f32 to vector<2x64xf32>
    %295 = arith.addf %294, %293 : vector<2x64xf32>
    %cst_79 = arith.constant 5.000000e-01 : f32
    %296 = vector.broadcast %cst_79 : f32 to vector<2x64xf32>
    %297 = arith.mulf %296, %295 : vector<2x64xf32>
    %298 = vector.extract_strided_slice %297 {offsets = [0, 0], sizes = [2, 32], strides = [1, 1]} : vector<2x64xf32> to vector<2x32xf32>
    %299 = vector.extract_strided_slice %297 {offsets = [0, 32], sizes = [2, 32], strides = [1, 1]} : vector<2x64xf32> to vector<2x32xf32>
    %300 = vector.extract_strided_slice %288 {offsets = [0, 64], sizes = [2, 32], strides = [1, 1]} : vector<2x128xf32> to vector<2x32xf32>
    %301 = arith.addf %300, %24 : vector<2x32xf32>
    %302 = vector.extract_strided_slice %288 {offsets = [0, 96], sizes = [2, 32], strides = [1, 1]} : vector<2x128xf32> to vector<2x32xf32>
    %303 = arith.addf %302, %25 : vector<2x32xf32>
    %304 = arith.mulf %298, %303 : vector<2x32xf32>
    %305 = arith.addf %301, %304 : vector<2x32xf32>
    %306 = math.tanh %305 : vector<2x32xf32>
    %cst_80 = arith.constant 1.000000e+00 : f32
    %307 = vector.broadcast %cst_80 : f32 to vector<2x32xf32>
    %308 = arith.subf %307, %299 : vector<2x32xf32>
    %309 = arith.mulf %308, %306 : vector<2x32xf32>
    %310 = arith.mulf %299, %258 : vector<2x32xf32>
    %311 = arith.addf %309, %310 : vector<2x32xf32>
    %312 = vector.extract_strided_slice %44 {offsets = [40, 0], sizes = [2, 128], strides = [1, 1]} : vector<64x128xf32> to vector<2x128xf32>
    %313 = arith.truncf %285 : vector<2x32xf32> to vector<2x32xbf16>
    %cst_81 = arith.constant dense<0.000000e+00> : vector<2x128xf32>
    %314 = tpu.matmul %313, %3, %cst_81 {dimension_numbers = #tpu.dot_dimension_numbers<[1], [0], [0], [1], [0, 0, 1, 1], [], []>} : vector<2x32xbf16>, vector<32x128xbf16>, vector<2x128xf32> -> vector<2x128xf32>
    %315 = arith.addf %312, %314 : vector<2x128xf32>
    %316 = vector.extract_strided_slice %315 {offsets = [0, 0], sizes = [2, 64], strides = [1, 1]} : vector<2x128xf32> to vector<2x64xf32>
    %317 = arith.addf %316, %16 : vector<2x64xf32>
    %cst_82 = arith.constant 5.000000e-01 : f32
    %318 = vector.broadcast %cst_82 : f32 to vector<2x64xf32>
    %319 = arith.mulf %318, %317 : vector<2x64xf32>
    %320 = math.tanh %319 : vector<2x64xf32>
    %cst_83 = arith.constant 1.000000e+00 : f32
    %321 = vector.broadcast %cst_83 : f32 to vector<2x64xf32>
    %322 = arith.addf %321, %320 : vector<2x64xf32>
    %cst_84 = arith.constant 5.000000e-01 : f32
    %323 = vector.broadcast %cst_84 : f32 to vector<2x64xf32>
    %324 = arith.mulf %323, %322 : vector<2x64xf32>
    %325 = vector.extract_strided_slice %324 {offsets = [0, 0], sizes = [2, 32], strides = [1, 1]} : vector<2x64xf32> to vector<2x32xf32>
    %326 = vector.extract_strided_slice %324 {offsets = [0, 32], sizes = [2, 32], strides = [1, 1]} : vector<2x64xf32> to vector<2x32xf32>
    %327 = vector.extract_strided_slice %315 {offsets = [0, 64], sizes = [2, 32], strides = [1, 1]} : vector<2x128xf32> to vector<2x32xf32>
    %328 = arith.addf %327, %17 : vector<2x32xf32>
    %329 = vector.extract_strided_slice %315 {offsets = [0, 96], sizes = [2, 32], strides = [1, 1]} : vector<2x128xf32> to vector<2x32xf32>
    %330 = arith.addf %329, %18 : vector<2x32xf32>
    %331 = arith.mulf %325, %330 : vector<2x32xf32>
    %332 = arith.addf %328, %331 : vector<2x32xf32>
    %333 = math.tanh %332 : vector<2x32xf32>
    %cst_85 = arith.constant 1.000000e+00 : f32
    %334 = vector.broadcast %cst_85 : f32 to vector<2x32xf32>
    %335 = arith.subf %334, %326 : vector<2x32xf32>
    %336 = arith.mulf %335, %333 : vector<2x32xf32>
    %337 = arith.mulf %326, %285 : vector<2x32xf32>
    %338 = arith.addf %336, %337 : vector<2x32xf32>
    %339 = tpu.concatenate %338, %311 in 1 : vector<2x32xf32>, vector<2x32xf32> -> vector<2x64xf32>
    %340 = arith.truncf %339 : vector<2x64xf32> to vector<2x64xbf16>
    %cst_86 = arith.constant dense<0.000000e+00> : vector<2x128xf32>
    %341 = tpu.matmul %340, %5, %cst_86 {dimension_numbers = #tpu.dot_dimension_numbers<[1], [0], [0], [1], [0, 0, 1, 1], [], []>} : vector<2x64xbf16>, vector<64x128xbf16>, vector<2x128xf32> -> vector<2x128xf32>
    %342 = vector.extract_strided_slice %341 {offsets = [0, 0], sizes = [2, 64], strides = [1, 1]} : vector<2x128xf32> to vector<2x64xf32>
    %343 = arith.addf %342, %23 : vector<2x64xf32>
    %cst_87 = arith.constant 5.000000e-01 : f32
    %344 = vector.broadcast %cst_87 : f32 to vector<2x64xf32>
    %345 = arith.mulf %344, %343 : vector<2x64xf32>
    %346 = math.tanh %345 : vector<2x64xf32>
    %cst_88 = arith.constant 1.000000e+00 : f32
    %347 = vector.broadcast %cst_88 : f32 to vector<2x64xf32>
    %348 = arith.addf %347, %346 : vector<2x64xf32>
    %cst_89 = arith.constant 5.000000e-01 : f32
    %349 = vector.broadcast %cst_89 : f32 to vector<2x64xf32>
    %350 = arith.mulf %349, %348 : vector<2x64xf32>
    %351 = vector.extract_strided_slice %350 {offsets = [0, 0], sizes = [2, 32], strides = [1, 1]} : vector<2x64xf32> to vector<2x32xf32>
    %352 = vector.extract_strided_slice %350 {offsets = [0, 32], sizes = [2, 32], strides = [1, 1]} : vector<2x64xf32> to vector<2x32xf32>
    %353 = vector.extract_strided_slice %341 {offsets = [0, 64], sizes = [2, 32], strides = [1, 1]} : vector<2x128xf32> to vector<2x32xf32>
    %354 = arith.addf %353, %24 : vector<2x32xf32>
    %355 = vector.extract_strided_slice %341 {offsets = [0, 96], sizes = [2, 32], strides = [1, 1]} : vector<2x128xf32> to vector<2x32xf32>
    %356 = arith.addf %355, %25 : vector<2x32xf32>
    %357 = arith.mulf %351, %356 : vector<2x32xf32>
    %358 = arith.addf %354, %357 : vector<2x32xf32>
    %359 = math.tanh %358 : vector<2x32xf32>
    %cst_90 = arith.constant 1.000000e+00 : f32
    %360 = vector.broadcast %cst_90 : f32 to vector<2x32xf32>
    %361 = arith.subf %360, %352 : vector<2x32xf32>
    %362 = arith.mulf %361, %359 : vector<2x32xf32>
    %363 = arith.mulf %352, %311 : vector<2x32xf32>
    %364 = arith.addf %362, %363 : vector<2x32xf32>
    %365 = vector.extract_strided_slice %44 {offsets = [48, 0], sizes = [2, 128], strides = [1, 1]} : vector<64x128xf32> to vector<2x128xf32>
    %366 = arith.truncf %338 : vector<2x32xf32> to vector<2x32xbf16>
    %cst_91 = arith.constant dense<0.000000e+00> : vector<2x128xf32>
    %367 = tpu.matmul %366, %3, %cst_91 {dimension_numbers = #tpu.dot_dimension_numbers<[1], [0], [0], [1], [0, 0, 1, 1], [], []>} : vector<2x32xbf16>, vector<32x128xbf16>, vector<2x128xf32> -> vector<2x128xf32>
    %368 = arith.addf %365, %367 : vector<2x128xf32>
    %369 = vector.extract_strided_slice %368 {offsets = [0, 0], sizes = [2, 64], strides = [1, 1]} : vector<2x128xf32> to vector<2x64xf32>
    %370 = arith.addf %369, %16 : vector<2x64xf32>
    %cst_92 = arith.constant 5.000000e-01 : f32
    %371 = vector.broadcast %cst_92 : f32 to vector<2x64xf32>
    %372 = arith.mulf %371, %370 : vector<2x64xf32>
    %373 = math.tanh %372 : vector<2x64xf32>
    %cst_93 = arith.constant 1.000000e+00 : f32
    %374 = vector.broadcast %cst_93 : f32 to vector<2x64xf32>
    %375 = arith.addf %374, %373 : vector<2x64xf32>
    %cst_94 = arith.constant 5.000000e-01 : f32
    %376 = vector.broadcast %cst_94 : f32 to vector<2x64xf32>
    %377 = arith.mulf %376, %375 : vector<2x64xf32>
    %378 = vector.extract_strided_slice %377 {offsets = [0, 0], sizes = [2, 32], strides = [1, 1]} : vector<2x64xf32> to vector<2x32xf32>
    %379 = vector.extract_strided_slice %377 {offsets = [0, 32], sizes = [2, 32], strides = [1, 1]} : vector<2x64xf32> to vector<2x32xf32>
    %380 = vector.extract_strided_slice %368 {offsets = [0, 64], sizes = [2, 32], strides = [1, 1]} : vector<2x128xf32> to vector<2x32xf32>
    %381 = arith.addf %380, %17 : vector<2x32xf32>
    %382 = vector.extract_strided_slice %368 {offsets = [0, 96], sizes = [2, 32], strides = [1, 1]} : vector<2x128xf32> to vector<2x32xf32>
    %383 = arith.addf %382, %18 : vector<2x32xf32>
    %384 = arith.mulf %378, %383 : vector<2x32xf32>
    %385 = arith.addf %381, %384 : vector<2x32xf32>
    %386 = math.tanh %385 : vector<2x32xf32>
    %cst_95 = arith.constant 1.000000e+00 : f32
    %387 = vector.broadcast %cst_95 : f32 to vector<2x32xf32>
    %388 = arith.subf %387, %379 : vector<2x32xf32>
    %389 = arith.mulf %388, %386 : vector<2x32xf32>
    %390 = arith.mulf %379, %338 : vector<2x32xf32>
    %391 = arith.addf %389, %390 : vector<2x32xf32>
    %392 = tpu.concatenate %391, %364 in 1 : vector<2x32xf32>, vector<2x32xf32> -> vector<2x64xf32>
    %393 = arith.truncf %392 : vector<2x64xf32> to vector<2x64xbf16>
    %cst_96 = arith.constant dense<0.000000e+00> : vector<2x128xf32>
    %394 = tpu.matmul %393, %5, %cst_96 {dimension_numbers = #tpu.dot_dimension_numbers<[1], [0], [0], [1], [0, 0, 1, 1], [], []>} : vector<2x64xbf16>, vector<64x128xbf16>, vector<2x128xf32> -> vector<2x128xf32>
    %395 = vector.extract_strided_slice %394 {offsets = [0, 0], sizes = [2, 64], strides = [1, 1]} : vector<2x128xf32> to vector<2x64xf32>
    %396 = arith.addf %395, %23 : vector<2x64xf32>
    %cst_97 = arith.constant 5.000000e-01 : f32
    %397 = vector.broadcast %cst_97 : f32 to vector<2x64xf32>
    %398 = arith.mulf %397, %396 : vector<2x64xf32>
    %399 = math.tanh %398 : vector<2x64xf32>
    %cst_98 = arith.constant 1.000000e+00 : f32
    %400 = vector.broadcast %cst_98 : f32 to vector<2x64xf32>
    %401 = arith.addf %400, %399 : vector<2x64xf32>
    %cst_99 = arith.constant 5.000000e-01 : f32
    %402 = vector.broadcast %cst_99 : f32 to vector<2x64xf32>
    %403 = arith.mulf %402, %401 : vector<2x64xf32>
    %404 = vector.extract_strided_slice %403 {offsets = [0, 0], sizes = [2, 32], strides = [1, 1]} : vector<2x64xf32> to vector<2x32xf32>
    %405 = vector.extract_strided_slice %403 {offsets = [0, 32], sizes = [2, 32], strides = [1, 1]} : vector<2x64xf32> to vector<2x32xf32>
    %406 = vector.extract_strided_slice %394 {offsets = [0, 64], sizes = [2, 32], strides = [1, 1]} : vector<2x128xf32> to vector<2x32xf32>
    %407 = arith.addf %406, %24 : vector<2x32xf32>
    %408 = vector.extract_strided_slice %394 {offsets = [0, 96], sizes = [2, 32], strides = [1, 1]} : vector<2x128xf32> to vector<2x32xf32>
    %409 = arith.addf %408, %25 : vector<2x32xf32>
    %410 = arith.mulf %404, %409 : vector<2x32xf32>
    %411 = arith.addf %407, %410 : vector<2x32xf32>
    %412 = math.tanh %411 : vector<2x32xf32>
    %cst_100 = arith.constant 1.000000e+00 : f32
    %413 = vector.broadcast %cst_100 : f32 to vector<2x32xf32>
    %414 = arith.subf %413, %405 : vector<2x32xf32>
    %415 = arith.mulf %414, %412 : vector<2x32xf32>
    %416 = arith.mulf %405, %364 : vector<2x32xf32>
    %417 = arith.addf %415, %416 : vector<2x32xf32>
    %418 = vector.extract_strided_slice %44 {offsets = [56, 0], sizes = [2, 128], strides = [1, 1]} : vector<64x128xf32> to vector<2x128xf32>
    %419 = arith.truncf %391 : vector<2x32xf32> to vector<2x32xbf16>
    %cst_101 = arith.constant dense<0.000000e+00> : vector<2x128xf32>
    %420 = tpu.matmul %419, %3, %cst_101 {dimension_numbers = #tpu.dot_dimension_numbers<[1], [0], [0], [1], [0, 0, 1, 1], [], []>} : vector<2x32xbf16>, vector<32x128xbf16>, vector<2x128xf32> -> vector<2x128xf32>
    %421 = arith.addf %418, %420 : vector<2x128xf32>
    %422 = vector.extract_strided_slice %421 {offsets = [0, 0], sizes = [2, 64], strides = [1, 1]} : vector<2x128xf32> to vector<2x64xf32>
    %423 = arith.addf %422, %16 : vector<2x64xf32>
    %cst_102 = arith.constant 5.000000e-01 : f32
    %424 = vector.broadcast %cst_102 : f32 to vector<2x64xf32>
    %425 = arith.mulf %424, %423 : vector<2x64xf32>
    %426 = math.tanh %425 : vector<2x64xf32>
    %cst_103 = arith.constant 1.000000e+00 : f32
    %427 = vector.broadcast %cst_103 : f32 to vector<2x64xf32>
    %428 = arith.addf %427, %426 : vector<2x64xf32>
    %cst_104 = arith.constant 5.000000e-01 : f32
    %429 = vector.broadcast %cst_104 : f32 to vector<2x64xf32>
    %430 = arith.mulf %429, %428 : vector<2x64xf32>
    %431 = vector.extract_strided_slice %430 {offsets = [0, 0], sizes = [2, 32], strides = [1, 1]} : vector<2x64xf32> to vector<2x32xf32>
    %432 = vector.extract_strided_slice %430 {offsets = [0, 32], sizes = [2, 32], strides = [1, 1]} : vector<2x64xf32> to vector<2x32xf32>
    %433 = vector.extract_strided_slice %421 {offsets = [0, 64], sizes = [2, 32], strides = [1, 1]} : vector<2x128xf32> to vector<2x32xf32>
    %434 = arith.addf %433, %17 : vector<2x32xf32>
    %435 = vector.extract_strided_slice %421 {offsets = [0, 96], sizes = [2, 32], strides = [1, 1]} : vector<2x128xf32> to vector<2x32xf32>
    %436 = arith.addf %435, %18 : vector<2x32xf32>
    %437 = arith.mulf %431, %436 : vector<2x32xf32>
    %438 = arith.addf %434, %437 : vector<2x32xf32>
    %439 = math.tanh %438 : vector<2x32xf32>
    %cst_105 = arith.constant 1.000000e+00 : f32
    %440 = vector.broadcast %cst_105 : f32 to vector<2x32xf32>
    %441 = arith.subf %440, %432 : vector<2x32xf32>
    %442 = arith.mulf %441, %439 : vector<2x32xf32>
    %443 = arith.mulf %432, %391 : vector<2x32xf32>
    %444 = arith.addf %442, %443 : vector<2x32xf32>
    %445 = tpu.concatenate %444, %417 in 1 : vector<2x32xf32>, vector<2x32xf32> -> vector<2x64xf32>
    %446 = arith.truncf %445 : vector<2x64xf32> to vector<2x64xbf16>
    %cst_106 = arith.constant dense<0.000000e+00> : vector<2x128xf32>
    %447 = tpu.matmul %446, %5, %cst_106 {dimension_numbers = #tpu.dot_dimension_numbers<[1], [0], [0], [1], [0, 0, 1, 1], [], []>} : vector<2x64xbf16>, vector<64x128xbf16>, vector<2x128xf32> -> vector<2x128xf32>
    %448 = vector.extract_strided_slice %447 {offsets = [0, 0], sizes = [2, 64], strides = [1, 1]} : vector<2x128xf32> to vector<2x64xf32>
    %449 = arith.addf %448, %23 : vector<2x64xf32>
    %cst_107 = arith.constant 5.000000e-01 : f32
    %450 = vector.broadcast %cst_107 : f32 to vector<2x64xf32>
    %451 = arith.mulf %450, %449 : vector<2x64xf32>
    %452 = math.tanh %451 : vector<2x64xf32>
    %cst_108 = arith.constant 1.000000e+00 : f32
    %453 = vector.broadcast %cst_108 : f32 to vector<2x64xf32>
    %454 = arith.addf %453, %452 : vector<2x64xf32>
    %cst_109 = arith.constant 5.000000e-01 : f32
    %455 = vector.broadcast %cst_109 : f32 to vector<2x64xf32>
    %456 = arith.mulf %455, %454 : vector<2x64xf32>
    %457 = vector.extract_strided_slice %456 {offsets = [0, 0], sizes = [2, 32], strides = [1, 1]} : vector<2x64xf32> to vector<2x32xf32>
    %458 = vector.extract_strided_slice %456 {offsets = [0, 32], sizes = [2, 32], strides = [1, 1]} : vector<2x64xf32> to vector<2x32xf32>
    %459 = vector.extract_strided_slice %447 {offsets = [0, 64], sizes = [2, 32], strides = [1, 1]} : vector<2x128xf32> to vector<2x32xf32>
    %460 = arith.addf %459, %24 : vector<2x32xf32>
    %461 = vector.extract_strided_slice %447 {offsets = [0, 96], sizes = [2, 32], strides = [1, 1]} : vector<2x128xf32> to vector<2x32xf32>
    %462 = arith.addf %461, %25 : vector<2x32xf32>
    %463 = arith.mulf %457, %462 : vector<2x32xf32>
    %464 = arith.addf %460, %463 : vector<2x32xf32>
    %465 = math.tanh %464 : vector<2x32xf32>
    %cst_110 = arith.constant 1.000000e+00 : f32
    %466 = vector.broadcast %cst_110 : f32 to vector<2x32xf32>
    %467 = arith.subf %466, %458 : vector<2x32xf32>
    %468 = arith.mulf %467, %465 : vector<2x32xf32>
    %469 = arith.mulf %458, %417 : vector<2x32xf32>
    %470 = arith.addf %468, %469 : vector<2x32xf32>
    %471 = arith.truncf %444 : vector<2x32xf32> to vector<2x32xbf16>
    %cst_111 = arith.constant dense<0.000000e+00> : vector<2x128xf32>
    %472 = tpu.matmul %471, %7, %cst_111 {dimension_numbers = #tpu.dot_dimension_numbers<[1], [0], [0], [1], [0, 0, 1, 1], [], []>} : vector<2x32xbf16>, vector<32x128xbf16>, vector<2x128xf32> -> vector<2x128xf32>
    %473 = vector.extract_strided_slice %472 {offsets = [0, 0], sizes = [2, 64], strides = [1, 1]} : vector<2x128xf32> to vector<2x64xf32>
    %474 = arith.addf %473, %30 : vector<2x64xf32>
    %cst_112 = arith.constant 5.000000e-01 : f32
    %475 = vector.broadcast %cst_112 : f32 to vector<2x64xf32>
    %476 = arith.mulf %475, %474 : vector<2x64xf32>
    %477 = math.tanh %476 : vector<2x64xf32>
    %cst_113 = arith.constant 1.000000e+00 : f32
    %478 = vector.broadcast %cst_113 : f32 to vector<2x64xf32>
    %479 = arith.addf %478, %477 : vector<2x64xf32>
    %cst_114 = arith.constant 5.000000e-01 : f32
    %480 = vector.broadcast %cst_114 : f32 to vector<2x64xf32>
    %481 = arith.mulf %480, %479 : vector<2x64xf32>
    %482 = vector.extract_strided_slice %481 {offsets = [0, 0], sizes = [2, 32], strides = [1, 1]} : vector<2x64xf32> to vector<2x32xf32>
    %483 = vector.extract_strided_slice %481 {offsets = [0, 32], sizes = [2, 32], strides = [1, 1]} : vector<2x64xf32> to vector<2x32xf32>
    %484 = vector.extract_strided_slice %472 {offsets = [0, 64], sizes = [2, 32], strides = [1, 1]} : vector<2x128xf32> to vector<2x32xf32>
    %485 = arith.addf %484, %31 : vector<2x32xf32>
    %486 = vector.extract_strided_slice %472 {offsets = [0, 96], sizes = [2, 32], strides = [1, 1]} : vector<2x128xf32> to vector<2x32xf32>
    %487 = arith.addf %486, %32 : vector<2x32xf32>
    %488 = arith.mulf %482, %487 : vector<2x32xf32>
    %489 = arith.addf %485, %488 : vector<2x32xf32>
    %490 = math.tanh %489 : vector<2x32xf32>
    %cst_115 = arith.constant 1.000000e+00 : f32
    %491 = vector.broadcast %cst_115 : f32 to vector<2x32xf32>
    %492 = arith.subf %491, %483 : vector<2x32xf32>
    %493 = arith.mulf %492, %490 : vector<2x32xf32>
    %494 = arith.mulf %483, %444 : vector<2x32xf32>
    %495 = arith.addf %493, %494 : vector<2x32xf32>
    %496 = tpu.concatenate %495, %470 in 1 : vector<2x32xf32>, vector<2x32xf32> -> vector<2x64xf32>
    %497 = arith.truncf %496 : vector<2x64xf32> to vector<2x64xbf16>
    %cst_116 = arith.constant dense<0.000000e+00> : vector<2x128xf32>
    %498 = tpu.matmul %497, %9, %cst_116 {dimension_numbers = #tpu.dot_dimension_numbers<[1], [0], [0], [1], [0, 0, 1, 1], [], []>} : vector<2x64xbf16>, vector<64x128xbf16>, vector<2x128xf32> -> vector<2x128xf32>
    %499 = vector.extract_strided_slice %498 {offsets = [0, 0], sizes = [2, 64], strides = [1, 1]} : vector<2x128xf32> to vector<2x64xf32>
    %500 = arith.addf %499, %37 : vector<2x64xf32>
    %cst_117 = arith.constant 5.000000e-01 : f32
    %501 = vector.broadcast %cst_117 : f32 to vector<2x64xf32>
    %502 = arith.mulf %501, %500 : vector<2x64xf32>
    %503 = math.tanh %502 : vector<2x64xf32>
    %cst_118 = arith.constant 1.000000e+00 : f32
    %504 = vector.broadcast %cst_118 : f32 to vector<2x64xf32>
    %505 = arith.addf %504, %503 : vector<2x64xf32>
    %cst_119 = arith.constant 5.000000e-01 : f32
    %506 = vector.broadcast %cst_119 : f32 to vector<2x64xf32>
    %507 = arith.mulf %506, %505 : vector<2x64xf32>
    %508 = vector.extract_strided_slice %507 {offsets = [0, 0], sizes = [2, 32], strides = [1, 1]} : vector<2x64xf32> to vector<2x32xf32>
    %509 = vector.extract_strided_slice %507 {offsets = [0, 32], sizes = [2, 32], strides = [1, 1]} : vector<2x64xf32> to vector<2x32xf32>
    %510 = vector.extract_strided_slice %498 {offsets = [0, 64], sizes = [2, 32], strides = [1, 1]} : vector<2x128xf32> to vector<2x32xf32>
    %511 = arith.addf %510, %38 : vector<2x32xf32>
    %512 = vector.extract_strided_slice %498 {offsets = [0, 96], sizes = [2, 32], strides = [1, 1]} : vector<2x128xf32> to vector<2x32xf32>
    %513 = arith.addf %512, %39 : vector<2x32xf32>
    %514 = arith.mulf %508, %513 : vector<2x32xf32>
    %515 = arith.addf %511, %514 : vector<2x32xf32>
    %516 = math.tanh %515 : vector<2x32xf32>
    %cst_120 = arith.constant 1.000000e+00 : f32
    %517 = vector.broadcast %cst_120 : f32 to vector<2x32xf32>
    %518 = arith.subf %517, %509 : vector<2x32xf32>
    %519 = arith.mulf %518, %516 : vector<2x32xf32>
    %520 = arith.mulf %509, %470 : vector<2x32xf32>
    %521 = arith.addf %519, %520 : vector<2x32xf32>
    %522 = arith.truncf %495 : vector<2x32xf32> to vector<2x32xbf16>
    %cst_121 = arith.constant dense<0.000000e+00> : vector<2x128xf32>
    %523 = tpu.matmul %522, %7, %cst_121 {dimension_numbers = #tpu.dot_dimension_numbers<[1], [0], [0], [1], [0, 0, 1, 1], [], []>} : vector<2x32xbf16>, vector<32x128xbf16>, vector<2x128xf32> -> vector<2x128xf32>
    %524 = vector.extract_strided_slice %523 {offsets = [0, 0], sizes = [2, 64], strides = [1, 1]} : vector<2x128xf32> to vector<2x64xf32>
    %525 = arith.addf %524, %30 : vector<2x64xf32>
    %cst_122 = arith.constant 5.000000e-01 : f32
    %526 = vector.broadcast %cst_122 : f32 to vector<2x64xf32>
    %527 = arith.mulf %526, %525 : vector<2x64xf32>
    %528 = math.tanh %527 : vector<2x64xf32>
    %cst_123 = arith.constant 1.000000e+00 : f32
    %529 = vector.broadcast %cst_123 : f32 to vector<2x64xf32>
    %530 = arith.addf %529, %528 : vector<2x64xf32>
    %cst_124 = arith.constant 5.000000e-01 : f32
    %531 = vector.broadcast %cst_124 : f32 to vector<2x64xf32>
    %532 = arith.mulf %531, %530 : vector<2x64xf32>
    %533 = vector.extract_strided_slice %532 {offsets = [0, 0], sizes = [2, 32], strides = [1, 1]} : vector<2x64xf32> to vector<2x32xf32>
    %534 = vector.extract_strided_slice %532 {offsets = [0, 32], sizes = [2, 32], strides = [1, 1]} : vector<2x64xf32> to vector<2x32xf32>
    %535 = vector.extract_strided_slice %523 {offsets = [0, 64], sizes = [2, 32], strides = [1, 1]} : vector<2x128xf32> to vector<2x32xf32>
    %536 = arith.addf %535, %31 : vector<2x32xf32>
    %537 = vector.extract_strided_slice %523 {offsets = [0, 96], sizes = [2, 32], strides = [1, 1]} : vector<2x128xf32> to vector<2x32xf32>
    %538 = arith.addf %537, %32 : vector<2x32xf32>
    %539 = arith.mulf %533, %538 : vector<2x32xf32>
    %540 = arith.addf %536, %539 : vector<2x32xf32>
    %541 = math.tanh %540 : vector<2x32xf32>
    %cst_125 = arith.constant 1.000000e+00 : f32
    %542 = vector.broadcast %cst_125 : f32 to vector<2x32xf32>
    %543 = arith.subf %542, %534 : vector<2x32xf32>
    %544 = arith.mulf %543, %541 : vector<2x32xf32>
    %545 = arith.mulf %534, %495 : vector<2x32xf32>
    %546 = arith.addf %544, %545 : vector<2x32xf32>
    %547 = tpu.concatenate %546, %521 in 1 : vector<2x32xf32>, vector<2x32xf32> -> vector<2x64xf32>
    %548 = arith.truncf %547 : vector<2x64xf32> to vector<2x64xbf16>
    %cst_126 = arith.constant dense<0.000000e+00> : vector<2x128xf32>
    %549 = tpu.matmul %548, %9, %cst_126 {dimension_numbers = #tpu.dot_dimension_numbers<[1], [0], [0], [1], [0, 0, 1, 1], [], []>} : vector<2x64xbf16>, vector<64x128xbf16>, vector<2x128xf32> -> vector<2x128xf32>
    %550 = vector.extract_strided_slice %549 {offsets = [0, 0], sizes = [2, 64], strides = [1, 1]} : vector<2x128xf32> to vector<2x64xf32>
    %551 = arith.addf %550, %37 : vector<2x64xf32>
    %cst_127 = arith.constant 5.000000e-01 : f32
    %552 = vector.broadcast %cst_127 : f32 to vector<2x64xf32>
    %553 = arith.mulf %552, %551 : vector<2x64xf32>
    %554 = math.tanh %553 : vector<2x64xf32>
    %cst_128 = arith.constant 1.000000e+00 : f32
    %555 = vector.broadcast %cst_128 : f32 to vector<2x64xf32>
    %556 = arith.addf %555, %554 : vector<2x64xf32>
    %cst_129 = arith.constant 5.000000e-01 : f32
    %557 = vector.broadcast %cst_129 : f32 to vector<2x64xf32>
    %558 = arith.mulf %557, %556 : vector<2x64xf32>
    %559 = vector.extract_strided_slice %558 {offsets = [0, 0], sizes = [2, 32], strides = [1, 1]} : vector<2x64xf32> to vector<2x32xf32>
    %560 = vector.extract_strided_slice %558 {offsets = [0, 32], sizes = [2, 32], strides = [1, 1]} : vector<2x64xf32> to vector<2x32xf32>
    %561 = vector.extract_strided_slice %549 {offsets = [0, 64], sizes = [2, 32], strides = [1, 1]} : vector<2x128xf32> to vector<2x32xf32>
    %562 = arith.addf %561, %38 : vector<2x32xf32>
    %563 = vector.extract_strided_slice %549 {offsets = [0, 96], sizes = [2, 32], strides = [1, 1]} : vector<2x128xf32> to vector<2x32xf32>
    %564 = arith.addf %563, %39 : vector<2x32xf32>
    %565 = arith.mulf %559, %564 : vector<2x32xf32>
    %566 = arith.addf %562, %565 : vector<2x32xf32>
    %567 = math.tanh %566 : vector<2x32xf32>
    %cst_130 = arith.constant 1.000000e+00 : f32
    %568 = vector.broadcast %cst_130 : f32 to vector<2x32xf32>
    %569 = arith.subf %568, %560 : vector<2x32xf32>
    %570 = arith.mulf %569, %567 : vector<2x32xf32>
    %571 = arith.mulf %560, %521 : vector<2x32xf32>
    %572 = arith.addf %570, %571 : vector<2x32xf32>
    %573 = arith.truncf %546 : vector<2x32xf32> to vector<2x32xbf16>
    %cst_131 = arith.constant dense<0.000000e+00> : vector<2x128xf32>
    %574 = tpu.matmul %573, %7, %cst_131 {dimension_numbers = #tpu.dot_dimension_numbers<[1], [0], [0], [1], [0, 0, 1, 1], [], []>} : vector<2x32xbf16>, vector<32x128xbf16>, vector<2x128xf32> -> vector<2x128xf32>
    %575 = vector.extract_strided_slice %574 {offsets = [0, 0], sizes = [2, 64], strides = [1, 1]} : vector<2x128xf32> to vector<2x64xf32>
    %576 = arith.addf %575, %30 : vector<2x64xf32>
    %cst_132 = arith.constant 5.000000e-01 : f32
    %577 = vector.broadcast %cst_132 : f32 to vector<2x64xf32>
    %578 = arith.mulf %577, %576 : vector<2x64xf32>
    %579 = math.tanh %578 : vector<2x64xf32>
    %cst_133 = arith.constant 1.000000e+00 : f32
    %580 = vector.broadcast %cst_133 : f32 to vector<2x64xf32>
    %581 = arith.addf %580, %579 : vector<2x64xf32>
    %cst_134 = arith.constant 5.000000e-01 : f32
    %582 = vector.broadcast %cst_134 : f32 to vector<2x64xf32>
    %583 = arith.mulf %582, %581 : vector<2x64xf32>
    %584 = vector.extract_strided_slice %583 {offsets = [0, 0], sizes = [2, 32], strides = [1, 1]} : vector<2x64xf32> to vector<2x32xf32>
    %585 = vector.extract_strided_slice %583 {offsets = [0, 32], sizes = [2, 32], strides = [1, 1]} : vector<2x64xf32> to vector<2x32xf32>
    %586 = vector.extract_strided_slice %574 {offsets = [0, 64], sizes = [2, 32], strides = [1, 1]} : vector<2x128xf32> to vector<2x32xf32>
    %587 = arith.addf %586, %31 : vector<2x32xf32>
    %588 = vector.extract_strided_slice %574 {offsets = [0, 96], sizes = [2, 32], strides = [1, 1]} : vector<2x128xf32> to vector<2x32xf32>
    %589 = arith.addf %588, %32 : vector<2x32xf32>
    %590 = arith.mulf %584, %589 : vector<2x32xf32>
    %591 = arith.addf %587, %590 : vector<2x32xf32>
    %592 = math.tanh %591 : vector<2x32xf32>
    %cst_135 = arith.constant 1.000000e+00 : f32
    %593 = vector.broadcast %cst_135 : f32 to vector<2x32xf32>
    %594 = arith.subf %593, %585 : vector<2x32xf32>
    %595 = arith.mulf %594, %592 : vector<2x32xf32>
    %596 = arith.mulf %585, %546 : vector<2x32xf32>
    %597 = arith.addf %595, %596 : vector<2x32xf32>
    %598 = tpu.concatenate %597, %572 in 1 : vector<2x32xf32>, vector<2x32xf32> -> vector<2x64xf32>
    %599 = arith.truncf %598 : vector<2x64xf32> to vector<2x64xbf16>
    %cst_136 = arith.constant dense<0.000000e+00> : vector<2x128xf32>
    %600 = tpu.matmul %599, %9, %cst_136 {dimension_numbers = #tpu.dot_dimension_numbers<[1], [0], [0], [1], [0, 0, 1, 1], [], []>} : vector<2x64xbf16>, vector<64x128xbf16>, vector<2x128xf32> -> vector<2x128xf32>
    %601 = vector.extract_strided_slice %600 {offsets = [0, 0], sizes = [2, 64], strides = [1, 1]} : vector<2x128xf32> to vector<2x64xf32>
    %602 = arith.addf %601, %37 : vector<2x64xf32>
    %cst_137 = arith.constant 5.000000e-01 : f32
    %603 = vector.broadcast %cst_137 : f32 to vector<2x64xf32>
    %604 = arith.mulf %603, %602 : vector<2x64xf32>
    %605 = math.tanh %604 : vector<2x64xf32>
    %cst_138 = arith.constant 1.000000e+00 : f32
    %606 = vector.broadcast %cst_138 : f32 to vector<2x64xf32>
    %607 = arith.addf %606, %605 : vector<2x64xf32>
    %cst_139 = arith.constant 5.000000e-01 : f32
    %608 = vector.broadcast %cst_139 : f32 to vector<2x64xf32>
    %609 = arith.mulf %608, %607 : vector<2x64xf32>
    %610 = vector.extract_strided_slice %609 {offsets = [0, 0], sizes = [2, 32], strides = [1, 1]} : vector<2x64xf32> to vector<2x32xf32>
    %611 = vector.extract_strided_slice %609 {offsets = [0, 32], sizes = [2, 32], strides = [1, 1]} : vector<2x64xf32> to vector<2x32xf32>
    %612 = vector.extract_strided_slice %600 {offsets = [0, 64], sizes = [2, 32], strides = [1, 1]} : vector<2x128xf32> to vector<2x32xf32>
    %613 = arith.addf %612, %38 : vector<2x32xf32>
    %614 = vector.extract_strided_slice %600 {offsets = [0, 96], sizes = [2, 32], strides = [1, 1]} : vector<2x128xf32> to vector<2x32xf32>
    %615 = arith.addf %614, %39 : vector<2x32xf32>
    %616 = arith.mulf %610, %615 : vector<2x32xf32>
    %617 = arith.addf %613, %616 : vector<2x32xf32>
    %618 = math.tanh %617 : vector<2x32xf32>
    %cst_140 = arith.constant 1.000000e+00 : f32
    %619 = vector.broadcast %cst_140 : f32 to vector<2x32xf32>
    %620 = arith.subf %619, %611 : vector<2x32xf32>
    %621 = arith.mulf %620, %618 : vector<2x32xf32>
    %622 = arith.mulf %611, %572 : vector<2x32xf32>
    %623 = arith.addf %621, %622 : vector<2x32xf32>
    %624 = arith.truncf %597 : vector<2x32xf32> to vector<2x32xbf16>
    %cst_141 = arith.constant dense<0.000000e+00> : vector<2x128xf32>
    %625 = tpu.matmul %624, %7, %cst_141 {dimension_numbers = #tpu.dot_dimension_numbers<[1], [0], [0], [1], [0, 0, 1, 1], [], []>} : vector<2x32xbf16>, vector<32x128xbf16>, vector<2x128xf32> -> vector<2x128xf32>
    %626 = vector.extract_strided_slice %625 {offsets = [0, 0], sizes = [2, 64], strides = [1, 1]} : vector<2x128xf32> to vector<2x64xf32>
    %627 = arith.addf %626, %30 : vector<2x64xf32>
    %cst_142 = arith.constant 5.000000e-01 : f32
    %628 = vector.broadcast %cst_142 : f32 to vector<2x64xf32>
    %629 = arith.mulf %628, %627 : vector<2x64xf32>
    %630 = math.tanh %629 : vector<2x64xf32>
    %cst_143 = arith.constant 1.000000e+00 : f32
    %631 = vector.broadcast %cst_143 : f32 to vector<2x64xf32>
    %632 = arith.addf %631, %630 : vector<2x64xf32>
    %cst_144 = arith.constant 5.000000e-01 : f32
    %633 = vector.broadcast %cst_144 : f32 to vector<2x64xf32>
    %634 = arith.mulf %633, %632 : vector<2x64xf32>
    %635 = vector.extract_strided_slice %634 {offsets = [0, 0], sizes = [2, 32], strides = [1, 1]} : vector<2x64xf32> to vector<2x32xf32>
    %636 = vector.extract_strided_slice %634 {offsets = [0, 32], sizes = [2, 32], strides = [1, 1]} : vector<2x64xf32> to vector<2x32xf32>
    %637 = vector.extract_strided_slice %625 {offsets = [0, 64], sizes = [2, 32], strides = [1, 1]} : vector<2x128xf32> to vector<2x32xf32>
    %638 = arith.addf %637, %31 : vector<2x32xf32>
    %639 = vector.extract_strided_slice %625 {offsets = [0, 96], sizes = [2, 32], strides = [1, 1]} : vector<2x128xf32> to vector<2x32xf32>
    %640 = arith.addf %639, %32 : vector<2x32xf32>
    %641 = arith.mulf %635, %640 : vector<2x32xf32>
    %642 = arith.addf %638, %641 : vector<2x32xf32>
    %643 = math.tanh %642 : vector<2x32xf32>
    %cst_145 = arith.constant 1.000000e+00 : f32
    %644 = vector.broadcast %cst_145 : f32 to vector<2x32xf32>
    %645 = arith.subf %644, %636 : vector<2x32xf32>
    %646 = arith.mulf %645, %643 : vector<2x32xf32>
    %647 = arith.mulf %636, %597 : vector<2x32xf32>
    %648 = arith.addf %646, %647 : vector<2x32xf32>
    %649 = tpu.concatenate %648, %623 in 1 : vector<2x32xf32>, vector<2x32xf32> -> vector<2x64xf32>
    %650 = arith.truncf %649 : vector<2x64xf32> to vector<2x64xbf16>
    %cst_146 = arith.constant dense<0.000000e+00> : vector<2x128xf32>
    %651 = tpu.matmul %650, %9, %cst_146 {dimension_numbers = #tpu.dot_dimension_numbers<[1], [0], [0], [1], [0, 0, 1, 1], [], []>} : vector<2x64xbf16>, vector<64x128xbf16>, vector<2x128xf32> -> vector<2x128xf32>
    %652 = vector.extract_strided_slice %651 {offsets = [0, 0], sizes = [2, 64], strides = [1, 1]} : vector<2x128xf32> to vector<2x64xf32>
    %653 = arith.addf %652, %37 : vector<2x64xf32>
    %cst_147 = arith.constant 5.000000e-01 : f32
    %654 = vector.broadcast %cst_147 : f32 to vector<2x64xf32>
    %655 = arith.mulf %654, %653 : vector<2x64xf32>
    %656 = math.tanh %655 : vector<2x64xf32>
    %cst_148 = arith.constant 1.000000e+00 : f32
    %657 = vector.broadcast %cst_148 : f32 to vector<2x64xf32>
    %658 = arith.addf %657, %656 : vector<2x64xf32>
    %cst_149 = arith.constant 5.000000e-01 : f32
    %659 = vector.broadcast %cst_149 : f32 to vector<2x64xf32>
    %660 = arith.mulf %659, %658 : vector<2x64xf32>
    %661 = vector.extract_strided_slice %660 {offsets = [0, 0], sizes = [2, 32], strides = [1, 1]} : vector<2x64xf32> to vector<2x32xf32>
    %662 = vector.extract_strided_slice %660 {offsets = [0, 32], sizes = [2, 32], strides = [1, 1]} : vector<2x64xf32> to vector<2x32xf32>
    %663 = vector.extract_strided_slice %651 {offsets = [0, 64], sizes = [2, 32], strides = [1, 1]} : vector<2x128xf32> to vector<2x32xf32>
    %664 = arith.addf %663, %38 : vector<2x32xf32>
    %665 = vector.extract_strided_slice %651 {offsets = [0, 96], sizes = [2, 32], strides = [1, 1]} : vector<2x128xf32> to vector<2x32xf32>
    %666 = arith.addf %665, %39 : vector<2x32xf32>
    %667 = arith.mulf %661, %666 : vector<2x32xf32>
    %668 = arith.addf %664, %667 : vector<2x32xf32>
    %669 = math.tanh %668 : vector<2x32xf32>
    %cst_150 = arith.constant 1.000000e+00 : f32
    %670 = vector.broadcast %cst_150 : f32 to vector<2x32xf32>
    %671 = arith.subf %670, %662 : vector<2x32xf32>
    %672 = arith.mulf %671, %669 : vector<2x32xf32>
    %673 = arith.mulf %662, %623 : vector<2x32xf32>
    %674 = arith.addf %672, %673 : vector<2x32xf32>
    %675 = arith.truncf %648 : vector<2x32xf32> to vector<2x32xbf16>
    %cst_151 = arith.constant dense<0.000000e+00> : vector<2x128xf32>
    %676 = tpu.matmul %675, %7, %cst_151 {dimension_numbers = #tpu.dot_dimension_numbers<[1], [0], [0], [1], [0, 0, 1, 1], [], []>} : vector<2x32xbf16>, vector<32x128xbf16>, vector<2x128xf32> -> vector<2x128xf32>
    %677 = vector.extract_strided_slice %676 {offsets = [0, 0], sizes = [2, 64], strides = [1, 1]} : vector<2x128xf32> to vector<2x64xf32>
    %678 = arith.addf %677, %30 : vector<2x64xf32>
    %cst_152 = arith.constant 5.000000e-01 : f32
    %679 = vector.broadcast %cst_152 : f32 to vector<2x64xf32>
    %680 = arith.mulf %679, %678 : vector<2x64xf32>
    %681 = math.tanh %680 : vector<2x64xf32>
    %cst_153 = arith.constant 1.000000e+00 : f32
    %682 = vector.broadcast %cst_153 : f32 to vector<2x64xf32>
    %683 = arith.addf %682, %681 : vector<2x64xf32>
    %cst_154 = arith.constant 5.000000e-01 : f32
    %684 = vector.broadcast %cst_154 : f32 to vector<2x64xf32>
    %685 = arith.mulf %684, %683 : vector<2x64xf32>
    %686 = vector.extract_strided_slice %685 {offsets = [0, 0], sizes = [2, 32], strides = [1, 1]} : vector<2x64xf32> to vector<2x32xf32>
    %687 = vector.extract_strided_slice %685 {offsets = [0, 32], sizes = [2, 32], strides = [1, 1]} : vector<2x64xf32> to vector<2x32xf32>
    %688 = vector.extract_strided_slice %676 {offsets = [0, 64], sizes = [2, 32], strides = [1, 1]} : vector<2x128xf32> to vector<2x32xf32>
    %689 = arith.addf %688, %31 : vector<2x32xf32>
    %690 = vector.extract_strided_slice %676 {offsets = [0, 96], sizes = [2, 32], strides = [1, 1]} : vector<2x128xf32> to vector<2x32xf32>
    %691 = arith.addf %690, %32 : vector<2x32xf32>
    %692 = arith.mulf %686, %691 : vector<2x32xf32>
    %693 = arith.addf %689, %692 : vector<2x32xf32>
    %694 = math.tanh %693 : vector<2x32xf32>
    %cst_155 = arith.constant 1.000000e+00 : f32
    %695 = vector.broadcast %cst_155 : f32 to vector<2x32xf32>
    %696 = arith.subf %695, %687 : vector<2x32xf32>
    %697 = arith.mulf %696, %694 : vector<2x32xf32>
    %698 = arith.mulf %687, %648 : vector<2x32xf32>
    %699 = arith.addf %697, %698 : vector<2x32xf32>
    %700 = tpu.concatenate %699, %674 in 1 : vector<2x32xf32>, vector<2x32xf32> -> vector<2x64xf32>
    %701 = arith.truncf %700 : vector<2x64xf32> to vector<2x64xbf16>
    %cst_156 = arith.constant dense<0.000000e+00> : vector<2x128xf32>
    %702 = tpu.matmul %701, %9, %cst_156 {dimension_numbers = #tpu.dot_dimension_numbers<[1], [0], [0], [1], [0, 0, 1, 1], [], []>} : vector<2x64xbf16>, vector<64x128xbf16>, vector<2x128xf32> -> vector<2x128xf32>
    %703 = vector.extract_strided_slice %702 {offsets = [0, 0], sizes = [2, 64], strides = [1, 1]} : vector<2x128xf32> to vector<2x64xf32>
    %704 = arith.addf %703, %37 : vector<2x64xf32>
    %cst_157 = arith.constant 5.000000e-01 : f32
    %705 = vector.broadcast %cst_157 : f32 to vector<2x64xf32>
    %706 = arith.mulf %705, %704 : vector<2x64xf32>
    %707 = math.tanh %706 : vector<2x64xf32>
    %cst_158 = arith.constant 1.000000e+00 : f32
    %708 = vector.broadcast %cst_158 : f32 to vector<2x64xf32>
    %709 = arith.addf %708, %707 : vector<2x64xf32>
    %cst_159 = arith.constant 5.000000e-01 : f32
    %710 = vector.broadcast %cst_159 : f32 to vector<2x64xf32>
    %711 = arith.mulf %710, %709 : vector<2x64xf32>
    %712 = vector.extract_strided_slice %711 {offsets = [0, 0], sizes = [2, 32], strides = [1, 1]} : vector<2x64xf32> to vector<2x32xf32>
    %713 = vector.extract_strided_slice %711 {offsets = [0, 32], sizes = [2, 32], strides = [1, 1]} : vector<2x64xf32> to vector<2x32xf32>
    %714 = vector.extract_strided_slice %702 {offsets = [0, 64], sizes = [2, 32], strides = [1, 1]} : vector<2x128xf32> to vector<2x32xf32>
    %715 = arith.addf %714, %38 : vector<2x32xf32>
    %716 = vector.extract_strided_slice %702 {offsets = [0, 96], sizes = [2, 32], strides = [1, 1]} : vector<2x128xf32> to vector<2x32xf32>
    %717 = arith.addf %716, %39 : vector<2x32xf32>
    %718 = arith.mulf %712, %717 : vector<2x32xf32>
    %719 = arith.addf %715, %718 : vector<2x32xf32>
    %720 = math.tanh %719 : vector<2x32xf32>
    %cst_160 = arith.constant 1.000000e+00 : f32
    %721 = vector.broadcast %cst_160 : f32 to vector<2x32xf32>
    %722 = arith.subf %721, %713 : vector<2x32xf32>
    %723 = arith.mulf %722, %720 : vector<2x32xf32>
    %724 = arith.mulf %713, %674 : vector<2x32xf32>
    %725 = arith.addf %723, %724 : vector<2x32xf32>
    %726 = arith.truncf %699 : vector<2x32xf32> to vector<2x32xbf16>
    %cst_161 = arith.constant dense<0.000000e+00> : vector<2x128xf32>
    %727 = tpu.matmul %726, %7, %cst_161 {dimension_numbers = #tpu.dot_dimension_numbers<[1], [0], [0], [1], [0, 0, 1, 1], [], []>} : vector<2x32xbf16>, vector<32x128xbf16>, vector<2x128xf32> -> vector<2x128xf32>
    %728 = vector.extract_strided_slice %727 {offsets = [0, 0], sizes = [2, 64], strides = [1, 1]} : vector<2x128xf32> to vector<2x64xf32>
    %729 = arith.addf %728, %30 : vector<2x64xf32>
    %cst_162 = arith.constant 5.000000e-01 : f32
    %730 = vector.broadcast %cst_162 : f32 to vector<2x64xf32>
    %731 = arith.mulf %730, %729 : vector<2x64xf32>
    %732 = math.tanh %731 : vector<2x64xf32>
    %cst_163 = arith.constant 1.000000e+00 : f32
    %733 = vector.broadcast %cst_163 : f32 to vector<2x64xf32>
    %734 = arith.addf %733, %732 : vector<2x64xf32>
    %cst_164 = arith.constant 5.000000e-01 : f32
    %735 = vector.broadcast %cst_164 : f32 to vector<2x64xf32>
    %736 = arith.mulf %735, %734 : vector<2x64xf32>
    %737 = vector.extract_strided_slice %736 {offsets = [0, 0], sizes = [2, 32], strides = [1, 1]} : vector<2x64xf32> to vector<2x32xf32>
    %738 = vector.extract_strided_slice %736 {offsets = [0, 32], sizes = [2, 32], strides = [1, 1]} : vector<2x64xf32> to vector<2x32xf32>
    %739 = vector.extract_strided_slice %727 {offsets = [0, 64], sizes = [2, 32], strides = [1, 1]} : vector<2x128xf32> to vector<2x32xf32>
    %740 = arith.addf %739, %31 : vector<2x32xf32>
    %741 = vector.extract_strided_slice %727 {offsets = [0, 96], sizes = [2, 32], strides = [1, 1]} : vector<2x128xf32> to vector<2x32xf32>
    %742 = arith.addf %741, %32 : vector<2x32xf32>
    %743 = arith.mulf %737, %742 : vector<2x32xf32>
    %744 = arith.addf %740, %743 : vector<2x32xf32>
    %745 = math.tanh %744 : vector<2x32xf32>
    %cst_165 = arith.constant 1.000000e+00 : f32
    %746 = vector.broadcast %cst_165 : f32 to vector<2x32xf32>
    %747 = arith.subf %746, %738 : vector<2x32xf32>
    %748 = arith.mulf %747, %745 : vector<2x32xf32>
    %749 = arith.mulf %738, %699 : vector<2x32xf32>
    %750 = arith.addf %748, %749 : vector<2x32xf32>
    %751 = tpu.concatenate %750, %725 in 1 : vector<2x32xf32>, vector<2x32xf32> -> vector<2x64xf32>
    %752 = arith.truncf %751 : vector<2x64xf32> to vector<2x64xbf16>
    %cst_166 = arith.constant dense<0.000000e+00> : vector<2x128xf32>
    %753 = tpu.matmul %752, %9, %cst_166 {dimension_numbers = #tpu.dot_dimension_numbers<[1], [0], [0], [1], [0, 0, 1, 1], [], []>} : vector<2x64xbf16>, vector<64x128xbf16>, vector<2x128xf32> -> vector<2x128xf32>
    %754 = vector.extract_strided_slice %753 {offsets = [0, 0], sizes = [2, 64], strides = [1, 1]} : vector<2x128xf32> to vector<2x64xf32>
    %755 = arith.addf %754, %37 : vector<2x64xf32>
    %cst_167 = arith.constant 5.000000e-01 : f32
    %756 = vector.broadcast %cst_167 : f32 to vector<2x64xf32>
    %757 = arith.mulf %756, %755 : vector<2x64xf32>
    %758 = math.tanh %757 : vector<2x64xf32>
    %cst_168 = arith.constant 1.000000e+00 : f32
    %759 = vector.broadcast %cst_168 : f32 to vector<2x64xf32>
    %760 = arith.addf %759, %758 : vector<2x64xf32>
    %cst_169 = arith.constant 5.000000e-01 : f32
    %761 = vector.broadcast %cst_169 : f32 to vector<2x64xf32>
    %762 = arith.mulf %761, %760 : vector<2x64xf32>
    %763 = vector.extract_strided_slice %762 {offsets = [0, 0], sizes = [2, 32], strides = [1, 1]} : vector<2x64xf32> to vector<2x32xf32>
    %764 = vector.extract_strided_slice %762 {offsets = [0, 32], sizes = [2, 32], strides = [1, 1]} : vector<2x64xf32> to vector<2x32xf32>
    %765 = vector.extract_strided_slice %753 {offsets = [0, 64], sizes = [2, 32], strides = [1, 1]} : vector<2x128xf32> to vector<2x32xf32>
    %766 = arith.addf %765, %38 : vector<2x32xf32>
    %767 = vector.extract_strided_slice %753 {offsets = [0, 96], sizes = [2, 32], strides = [1, 1]} : vector<2x128xf32> to vector<2x32xf32>
    %768 = arith.addf %767, %39 : vector<2x32xf32>
    %769 = arith.mulf %763, %768 : vector<2x32xf32>
    %770 = arith.addf %766, %769 : vector<2x32xf32>
    %771 = math.tanh %770 : vector<2x32xf32>
    %cst_170 = arith.constant 1.000000e+00 : f32
    %772 = vector.broadcast %cst_170 : f32 to vector<2x32xf32>
    %773 = arith.subf %772, %764 : vector<2x32xf32>
    %774 = arith.mulf %773, %771 : vector<2x32xf32>
    %775 = arith.mulf %764, %725 : vector<2x32xf32>
    %776 = arith.addf %774, %775 : vector<2x32xf32>
    %777 = arith.truncf %750 : vector<2x32xf32> to vector<2x32xbf16>
    %cst_171 = arith.constant dense<0.000000e+00> : vector<2x128xf32>
    %778 = tpu.matmul %777, %7, %cst_171 {dimension_numbers = #tpu.dot_dimension_numbers<[1], [0], [0], [1], [0, 0, 1, 1], [], []>} : vector<2x32xbf16>, vector<32x128xbf16>, vector<2x128xf32> -> vector<2x128xf32>
    %779 = vector.extract_strided_slice %778 {offsets = [0, 0], sizes = [2, 64], strides = [1, 1]} : vector<2x128xf32> to vector<2x64xf32>
    %780 = arith.addf %779, %30 : vector<2x64xf32>
    %cst_172 = arith.constant 5.000000e-01 : f32
    %781 = vector.broadcast %cst_172 : f32 to vector<2x64xf32>
    %782 = arith.mulf %781, %780 : vector<2x64xf32>
    %783 = math.tanh %782 : vector<2x64xf32>
    %cst_173 = arith.constant 1.000000e+00 : f32
    %784 = vector.broadcast %cst_173 : f32 to vector<2x64xf32>
    %785 = arith.addf %784, %783 : vector<2x64xf32>
    %cst_174 = arith.constant 5.000000e-01 : f32
    %786 = vector.broadcast %cst_174 : f32 to vector<2x64xf32>
    %787 = arith.mulf %786, %785 : vector<2x64xf32>
    %788 = vector.extract_strided_slice %787 {offsets = [0, 0], sizes = [2, 32], strides = [1, 1]} : vector<2x64xf32> to vector<2x32xf32>
    %789 = vector.extract_strided_slice %787 {offsets = [0, 32], sizes = [2, 32], strides = [1, 1]} : vector<2x64xf32> to vector<2x32xf32>
    %790 = vector.extract_strided_slice %778 {offsets = [0, 64], sizes = [2, 32], strides = [1, 1]} : vector<2x128xf32> to vector<2x32xf32>
    %791 = arith.addf %790, %31 : vector<2x32xf32>
    %792 = vector.extract_strided_slice %778 {offsets = [0, 96], sizes = [2, 32], strides = [1, 1]} : vector<2x128xf32> to vector<2x32xf32>
    %793 = arith.addf %792, %32 : vector<2x32xf32>
    %794 = arith.mulf %788, %793 : vector<2x32xf32>
    %795 = arith.addf %791, %794 : vector<2x32xf32>
    %796 = math.tanh %795 : vector<2x32xf32>
    %cst_175 = arith.constant 1.000000e+00 : f32
    %797 = vector.broadcast %cst_175 : f32 to vector<2x32xf32>
    %798 = arith.subf %797, %789 : vector<2x32xf32>
    %799 = arith.mulf %798, %796 : vector<2x32xf32>
    %800 = arith.mulf %789, %750 : vector<2x32xf32>
    %801 = arith.addf %799, %800 : vector<2x32xf32>
    %802 = tpu.concatenate %801, %776 in 1 : vector<2x32xf32>, vector<2x32xf32> -> vector<2x64xf32>
    %803 = arith.truncf %802 : vector<2x64xf32> to vector<2x64xbf16>
    %cst_176 = arith.constant dense<0.000000e+00> : vector<2x128xf32>
    %804 = tpu.matmul %803, %9, %cst_176 {dimension_numbers = #tpu.dot_dimension_numbers<[1], [0], [0], [1], [0, 0, 1, 1], [], []>} : vector<2x64xbf16>, vector<64x128xbf16>, vector<2x128xf32> -> vector<2x128xf32>
    %805 = vector.extract_strided_slice %804 {offsets = [0, 0], sizes = [2, 64], strides = [1, 1]} : vector<2x128xf32> to vector<2x64xf32>
    %806 = arith.addf %805, %37 : vector<2x64xf32>
    %cst_177 = arith.constant 5.000000e-01 : f32
    %807 = vector.broadcast %cst_177 : f32 to vector<2x64xf32>
    %808 = arith.mulf %807, %806 : vector<2x64xf32>
    %809 = math.tanh %808 : vector<2x64xf32>
    %cst_178 = arith.constant 1.000000e+00 : f32
    %810 = vector.broadcast %cst_178 : f32 to vector<2x64xf32>
    %811 = arith.addf %810, %809 : vector<2x64xf32>
    %cst_179 = arith.constant 5.000000e-01 : f32
    %812 = vector.broadcast %cst_179 : f32 to vector<2x64xf32>
    %813 = arith.mulf %812, %811 : vector<2x64xf32>
    %814 = vector.extract_strided_slice %813 {offsets = [0, 0], sizes = [2, 32], strides = [1, 1]} : vector<2x64xf32> to vector<2x32xf32>
    %815 = vector.extract_strided_slice %813 {offsets = [0, 32], sizes = [2, 32], strides = [1, 1]} : vector<2x64xf32> to vector<2x32xf32>
    %816 = vector.extract_strided_slice %804 {offsets = [0, 64], sizes = [2, 32], strides = [1, 1]} : vector<2x128xf32> to vector<2x32xf32>
    %817 = arith.addf %816, %38 : vector<2x32xf32>
    %818 = vector.extract_strided_slice %804 {offsets = [0, 96], sizes = [2, 32], strides = [1, 1]} : vector<2x128xf32> to vector<2x32xf32>
    %819 = arith.addf %818, %39 : vector<2x32xf32>
    %820 = arith.mulf %814, %819 : vector<2x32xf32>
    %821 = arith.addf %817, %820 : vector<2x32xf32>
    %822 = math.tanh %821 : vector<2x32xf32>
    %cst_180 = arith.constant 1.000000e+00 : f32
    %823 = vector.broadcast %cst_180 : f32 to vector<2x32xf32>
    %824 = arith.subf %823, %815 : vector<2x32xf32>
    %825 = arith.mulf %824, %822 : vector<2x32xf32>
    %826 = arith.mulf %815, %776 : vector<2x32xf32>
    %827 = arith.addf %825, %826 : vector<2x32xf32>
    %828 = arith.truncf %801 : vector<2x32xf32> to vector<2x32xbf16>
    %cst_181 = arith.constant dense<0.000000e+00> : vector<2x128xf32>
    %829 = tpu.matmul %828, %7, %cst_181 {dimension_numbers = #tpu.dot_dimension_numbers<[1], [0], [0], [1], [0, 0, 1, 1], [], []>} : vector<2x32xbf16>, vector<32x128xbf16>, vector<2x128xf32> -> vector<2x128xf32>
    %830 = vector.extract_strided_slice %829 {offsets = [0, 0], sizes = [2, 64], strides = [1, 1]} : vector<2x128xf32> to vector<2x64xf32>
    %831 = arith.addf %830, %30 : vector<2x64xf32>
    %cst_182 = arith.constant 5.000000e-01 : f32
    %832 = vector.broadcast %cst_182 : f32 to vector<2x64xf32>
    %833 = arith.mulf %832, %831 : vector<2x64xf32>
    %834 = math.tanh %833 : vector<2x64xf32>
    %cst_183 = arith.constant 1.000000e+00 : f32
    %835 = vector.broadcast %cst_183 : f32 to vector<2x64xf32>
    %836 = arith.addf %835, %834 : vector<2x64xf32>
    %cst_184 = arith.constant 5.000000e-01 : f32
    %837 = vector.broadcast %cst_184 : f32 to vector<2x64xf32>
    %838 = arith.mulf %837, %836 : vector<2x64xf32>
    %839 = vector.extract_strided_slice %838 {offsets = [0, 0], sizes = [2, 32], strides = [1, 1]} : vector<2x64xf32> to vector<2x32xf32>
    %840 = vector.extract_strided_slice %838 {offsets = [0, 32], sizes = [2, 32], strides = [1, 1]} : vector<2x64xf32> to vector<2x32xf32>
    %841 = vector.extract_strided_slice %829 {offsets = [0, 64], sizes = [2, 32], strides = [1, 1]} : vector<2x128xf32> to vector<2x32xf32>
    %842 = arith.addf %841, %31 : vector<2x32xf32>
    %843 = vector.extract_strided_slice %829 {offsets = [0, 96], sizes = [2, 32], strides = [1, 1]} : vector<2x128xf32> to vector<2x32xf32>
    %844 = arith.addf %843, %32 : vector<2x32xf32>
    %845 = arith.mulf %839, %844 : vector<2x32xf32>
    %846 = arith.addf %842, %845 : vector<2x32xf32>
    %847 = math.tanh %846 : vector<2x32xf32>
    %cst_185 = arith.constant 1.000000e+00 : f32
    %848 = vector.broadcast %cst_185 : f32 to vector<2x32xf32>
    %849 = arith.subf %848, %840 : vector<2x32xf32>
    %850 = arith.mulf %849, %847 : vector<2x32xf32>
    %851 = arith.mulf %840, %801 : vector<2x32xf32>
    %852 = arith.addf %850, %851 : vector<2x32xf32>
    %853 = tpu.concatenate %852, %827 in 1 : vector<2x32xf32>, vector<2x32xf32> -> vector<2x64xf32>
    %854 = arith.truncf %853 : vector<2x64xf32> to vector<2x64xbf16>
    %cst_186 = arith.constant dense<0.000000e+00> : vector<2x128xf32>
    %855 = tpu.matmul %854, %9, %cst_186 {dimension_numbers = #tpu.dot_dimension_numbers<[1], [0], [0], [1], [0, 0, 1, 1], [], []>} : vector<2x64xbf16>, vector<64x128xbf16>, vector<2x128xf32> -> vector<2x128xf32>
    %856 = vector.extract_strided_slice %855 {offsets = [0, 0], sizes = [2, 64], strides = [1, 1]} : vector<2x128xf32> to vector<2x64xf32>
    %857 = arith.addf %856, %37 : vector<2x64xf32>
    %cst_187 = arith.constant 5.000000e-01 : f32
    %858 = vector.broadcast %cst_187 : f32 to vector<2x64xf32>
    %859 = arith.mulf %858, %857 : vector<2x64xf32>
    %860 = math.tanh %859 : vector<2x64xf32>
    %cst_188 = arith.constant 1.000000e+00 : f32
    %861 = vector.broadcast %cst_188 : f32 to vector<2x64xf32>
    %862 = arith.addf %861, %860 : vector<2x64xf32>
    %cst_189 = arith.constant 5.000000e-01 : f32
    %863 = vector.broadcast %cst_189 : f32 to vector<2x64xf32>
    %864 = arith.mulf %863, %862 : vector<2x64xf32>
    %865 = vector.extract_strided_slice %864 {offsets = [0, 0], sizes = [2, 32], strides = [1, 1]} : vector<2x64xf32> to vector<2x32xf32>
    %866 = vector.extract_strided_slice %864 {offsets = [0, 32], sizes = [2, 32], strides = [1, 1]} : vector<2x64xf32> to vector<2x32xf32>
    %867 = vector.extract_strided_slice %855 {offsets = [0, 64], sizes = [2, 32], strides = [1, 1]} : vector<2x128xf32> to vector<2x32xf32>
    %868 = arith.addf %867, %38 : vector<2x32xf32>
    %869 = vector.extract_strided_slice %855 {offsets = [0, 96], sizes = [2, 32], strides = [1, 1]} : vector<2x128xf32> to vector<2x32xf32>
    %870 = arith.addf %869, %39 : vector<2x32xf32>
    %871 = arith.mulf %865, %870 : vector<2x32xf32>
    %872 = arith.addf %868, %871 : vector<2x32xf32>
    %873 = math.tanh %872 : vector<2x32xf32>
    %cst_190 = arith.constant 1.000000e+00 : f32
    %874 = vector.broadcast %cst_190 : f32 to vector<2x32xf32>
    %875 = arith.subf %874, %866 : vector<2x32xf32>
    %876 = arith.mulf %875, %873 : vector<2x32xf32>
    %877 = arith.mulf %866, %827 : vector<2x32xf32>
    %878 = arith.addf %876, %877 : vector<2x32xf32>
    %879 = tpu.concatenate %521, %572, %623, %674, %725, %776, %827, %878 in 0 : vector<2x32xf32>, vector<2x32xf32>, vector<2x32xf32>, vector<2x32xf32>, vector<2x32xf32>, vector<2x32xf32>, vector<2x32xf32>, vector<2x32xf32> -> vector<16x32xf32>
    %880 = arith.truncf %879 : vector<16x32xf32> to vector<16x32xbf16>
    %cst_191 = arith.constant dense<0.000000e+00> : vector<16x128xf32>
    %881 = tpu.matmul %880, %11, %cst_191 {dimension_numbers = #tpu.dot_dimension_numbers<[1], [0], [0], [1], [0, 0, 1, 1], [], []>} : vector<16x32xbf16>, vector<32x128xbf16>, vector<16x128xf32> -> vector<16x128xf32>
    %882 = vector.extract_strided_slice %881 {offsets = [0, 0], sizes = [16, 2], strides = [1, 1]} : vector<16x128xf32> to vector<16x2xf32>
    %883 = vector.broadcast %42 : vector<1x2xf32> to vector<16x2xf32>
    %884 = arith.addf %882, %883 : vector<16x2xf32>
    %c0_192 = arith.constant 0 : index
    %c0_193 = arith.constant 0 : index
    %885 = vector.load %arg3[%c0_192, %c0_193] : memref<16x2xf32, #tpu.memory_space<vmem>>, vector<16x2xf32>
    tpu.vector_store %arg3[%c0_192, %c0_193], %884 {strides = array<i32>} : memref<16x2xf32, #tpu.memory_space<vmem>>, vector<16x2xf32>,
    return
  }
}

</mosaic_0001>

<llo_original>
// kernel: tpu_custom_call.1
$region0: #{tpu_custom_call.1}
  #allocation0 [shape = 'u32[]', space=smem, size = 0x4, offset = 0x4, fixed_abs, tag = 'smem constant byte address 0x4 - core index']
  #allocation1 [shape = 'u32[72,128]{1,0:T(1,128)}', space=vmem, size = 0x9000, scoped, tag = 'internal scratch']
  %s0 = inlined_call_operand.vmem [shape: bf16[64,16], index: 0, kind: input, shape index: {}]
  %s1 = inlined_call_operand.hbm [shape: bf16[6,64,128], index: 1, kind: input, shape index: {}]
  %s2 = inlined_call_operand.vmem [shape: f32[5,1,128], index: 2, kind: input, shape index: {}]
  %s3 = inlined_call_operand.vmem [shape: f32[16,2], index: 3, kind: output, shape index: {}]
  %s4 = sld [smem:[#allocation0]]
  $region26: #{tpu_custom_call.1} parent=0
    _
  %s6 = ssub.s32 1, %s4
  %s7 = scalar_select 0, %s6, %s4
  $region1: #{tpu_custom_call.1} parent=0
    #allocation2 [shape = 'u8[98304]{0}', space=vmem, size = 0x18000, scoped, tag = 'input window, operand 1, single buffered']
    #allocation3 [shape = 's32[1]{0}', space=sflag, size = 0x4, scoped, tag = 'scoped memory for tpu_custom_call.1']
    %8 = vsyncpa [#allocation3], 0
    // Predicated region
    $region2: #{tpu_custom_call.1} parent=1 // pred_check
      _
    $region3: #{tpu_custom_call.1} parent=1 // pred_check_branch
      %10 = sbr.rel (0) target = $region5
    $region4: #{tpu_custom_call.1} parent=1 // pred_region
      _
    $region5: #{tpu_custom_call.1} parent=1 // pred_fallthru
      _
    // Predicated region
    $region6: #{tpu_custom_call.1} parent=1 // pred_check
      _
    $region7: #{tpu_custom_call.1} parent=1 // pred_check_branch
      %12 = sbr.rel (0) target = $region9
    $region8: #{tpu_custom_call.1} parent=1 // pred_region
      %14 = vsyncadd [#allocation3], 0
      %s15 = sshll.u32 %s1, 4
      %s16 = int_to_ptr.hbm [resolvable:$true] %s15
      %s17 = sshll.u32 [#allocation2], 4
      %s18 = int_to_ptr.vmem [resolvable:$true] %s17
      %23 = dma.hbm_to_vmem [thread:$0]  %s16, 3072, %s18, [#allocation3], 64, 64, 4
    $region9: #{tpu_custom_call.1} parent=1 // pred_fallthru
      _
    // Predicated region
    $region10: #{tpu_custom_call.1} parent=1 // pred_check
      _
    $region11: #{tpu_custom_call.1} parent=1 // pred_check_branch
      %25 = sbr.rel (0) target = $region13
    $region12: #{tpu_custom_call.1} parent=1 // pred_region
      _
    $region13: #{tpu_custom_call.1} parent=1 // pred_fallthru
      _
    // Predicated region
    $region14: #{tpu_custom_call.1} parent=1 // pred_check
      _
    $region15: #{tpu_custom_call.1} parent=1 // pred_check_branch
      %27 = sbr.rel (0) target = $region17
    $region16: #{tpu_custom_call.1} parent=1 // pred_region
      %29 = dma.done [#allocation3], 3072
    $region17: #{tpu_custom_call.1} parent=1 // pred_fallthru
      _
    %v31 = vld [vmem:[#allocation2] sm:$0xf]
    %v32 = vld [vmem:[#allocation2 + $0x4] sm:$0xf]
    %s33 = scalar_lea.vmem [#allocation2], 32
    %v34 = vld [vmem:[%s33] sm:$0xf]
    %v35 = vld [vmem:[%s33 + $0x4] sm:$0xf]
    %v36 = vld [vmem:[%s33 + $0x8] sm:$0xf]
    %v37 = vld [vmem:[%s33 + $0xc] sm:$0xf]
    %s38 = scalar_lea.vmem [#allocation2], 64
    %v39 = vld [vmem:[%s38] sm:$0xf]
    %v40 = vld [vmem:[%s38 + $0x4] sm:$0xf]
    %v41 = vld [vmem:[%s38 + $0x8] sm:$0xf]
    %v42 = vld [vmem:[%s38 + $0xc] sm:$0xf]
    %v43 = vld [vmem:[%s38 + $0x10] sm:$0xf]
    %v44 = vld [vmem:[%s38 + $0x14] sm:$0xf]
    %v45 = vld [vmem:[%s38 + $0x18] sm:$0xf]
    %v46 = vld [vmem:[%s38 + $0x1c] sm:$0xf]
    %s47 = scalar_lea.vmem [#allocation2], 96
    %v48 = vld [vmem:[%s47] sm:$0xf]
    %v49 = vld [vmem:[%s47 + $0x4] sm:$0xf]
    %v50 = vld [vmem:[%s47 + $0x8] sm:$0xf]
    %v51 = vld [vmem:[%s47 + $0xc] sm:$0xf]
    %s52 = scalar_lea.vmem [#allocation2], 128
    %v53 = vld [vmem:[%s52] sm:$0xf]
    %v54 = vld [vmem:[%s52 + $0x4] sm:$0xf]
    %v55 = vld [vmem:[%s52 + $0x8] sm:$0xf]
    %v56 = vld [vmem:[%s52 + $0xc] sm:$0xf]
    %v57 = vld [vmem:[%s52 + $0x10] sm:$0xf]
    %v58 = vld [vmem:[%s52 + $0x14] sm:$0xf]
    %v59 = vld [vmem:[%s52 + $0x18] sm:$0xf]
    %v60 = vld [vmem:[%s52 + $0x1c] sm:$0xf]
    %s61 = scalar_lea.vmem [#allocation2], 160
    %v62 = vld [vmem:[%s61] sm:$0xf]
    %v63 = vld [vmem:[%s61 + $0x4] sm:$0xf]
    %v64 = vld [vmem:[%s61 + $0x8] sm:$0xf]
    %v65 = vld [vmem:[%s61 + $0xc] sm:$0xf]
    %v66 = vld [vmem:[%s2] sm:$0x1]
    %v68 = vperm.slane %v66, 0
    %s70 = scalar_lea.vmem %s2, 1
    %v71 = vld [vmem:[%s70] sm:$0x1]
    %v73 = vperm.slane %v71, 0
    %s75 = scalar_lea.vmem %s2, 2
    %v76 = vld [vmem:[%s75] sm:$0x1]
    %v78 = vperm.slane %v76, 0
    %s80 = scalar_lea.vmem %s2, 3
    %v81 = vld [vmem:[%s80] sm:$0x1]
    %v83 = vperm.slane %v81, 0
    %s85 = scalar_lea.vmem %s2, 4
    %v86 = vld [vmem:[%s85] sm:$0x1]
    %v87 = vld [vmem:[%s0] sm:$0xf]
    %v88 = vld [vmem:[%s0 + $0x4] sm:$0xf]
    %v89 = vld [vmem:[%s0 + $0x8] sm:$0xf]
    %v90 = vld [vmem:[%s0 + $0xc] sm:$0xf]
    %v91 = vld [vmem:[%s0 + $0x10] sm:$0xf]
    %v92 = vld [vmem:[%s0 + $0x14] sm:$0xf]
    %v93 = vld [vmem:[%s0 + $0x18] sm:$0xf]
    %v94 = vld [vmem:[%s0 + $0x1c] sm:$0xf]
    %v103 = vunpack.c.l.b16 %v87
    %v104 = vunpack.c.l.b16 %v88
    %v105 = vunpack.c.l.b16 %v89
    %v106 = vunpack.c.l.b16 %v90
    %v107 = vunpack.c.l.b16 %v91
    %v108 = vunpack.c.l.b16 %v92
    %v109 = vunpack.c.l.b16 %v93
    %v110 = vunpack.c.l.b16 %v94
    %v111 = vpack.c.b16 %v104, %v103
    %v112 = vpack.c.b16 %v106, %v105
    %v113 = vpack.c.b16 %v108, %v107
    %v114 = vpack.c.b16 %v110, %v109
    %v117 = vunpack.c.l.b16 %v31
    %v118 = vunpack.c.l.b16 %v32
    %v119 = vpack.c.b16 %v118, %v117
    %vm121 = vcmask 130048
    %v123 = vsel %vm121, %v111, 0
    %v126 = vsel %vm121, %v112, 0
    %v129 = vsel %vm121, %v113, 0
    %v132 = vsel %vm121, %v114, 0
    %134 = vmatpush.bf16.msra.mxu0 0
    %135 = vmatpush.bf16.msra.mxu0 0
    %136 = vmatpush.bf16.msra.mxu0 0
    %137 = vmatpush.bf16.msra.mxu0 0
    %138 = vmatpush.bf16.msra.mxu0 0
    %139 = vmatpush.bf16.msra.mxu0 0
    %140 = vmatpush.bf16.msra.mxu0 0
    %141 = vmatpush.bf16.msra.mxu0 %v119
    %142 = vmatmul.bf16.gmra.mxu0 %v123
    %v143 = vpop.f32.mrf.mxu0
    %v144 = vadd.f32 0.0, %v143
    %v145 = vpop.f32.mrf.mxu0
    %v146 = vadd.f32 0.0, %v145
    %147 = vmatmul.bf16.gmra.mxu0 %v126
    %v148 = vpop.f32.mrf.mxu0
    %v149 = vadd.f32 0.0, %v148
    %v150 = vpop.f32.mrf.mxu0
    %v151 = vadd.f32 0.0, %v150
    %152 = vmatmul.bf16.gmra.mxu0 %v129
    %v153 = vpop.f32.mrf.mxu0
    %v154 = vadd.f32 0.0, %v153
    %v155 = vpop.f32.mrf.mxu0
    %v156 = vadd.f32 0.0, %v155
    %157 = vmatmul.bf16.gmra.mxu0 %v132
    %v158 = vpop.f32.mrf.mxu0
    %v159 = vadd.f32 0.0, %v158
    %v160 = vpop.f32.mrf.mxu0
    %v161 = vadd.f32 0.0, %v160
    %162 = vdwg.mxu0
    %v167 = vunpack.c.l.b16 %v34
    %v168 = vunpack.c.l.b16 %v35
    %v169 = vunpack.c.l.b16 %v36
    %v170 = vunpack.c.l.b16 %v37
    %v171 = vpack.c.b16 %v168, %v167
    %v172 = vpack.c.b16 %v170, %v169
    %vm175 = vcmask 261120
    %v177 = vsel %vm175, 0, 0
    %179 = vmatpush.bf16.msra.mxu0 0
    %180 = vmatpush.bf16.msra.mxu0 0
    %181 = vmatpush.bf16.msra.mxu0 0
    %182 = vmatpush.bf16.msra.mxu0 0
    %183 = vmatpush.bf16.msra.mxu0 0
    %184 = vmatpush.bf16.msra.mxu0 0
    %185 = vmatpush.bf16.msra.mxu0 %v172
    %186 = vmatpush.bf16.msra.mxu0 %v171
    %187 = vmatmul.bf16.gmra.mxu0 %v177
    %v188 = vpop.f32.mrf.mxu0
    %v189 = vadd.f32 0.0, %v188
    %v190 = vpop.f32.mrf.mxu0
    %191 = vdwg.mxu0
    %v192 = vadd.f32 %v144, %v189
    %v193 = vadd.f32 %v192, %v68
    %v194 = vmul.f32 %v193, 0.5
    %v195 = vtanh.pop %v194
    %v196 = vadd.f32 %v195, 1.0
    %v197 = vmul.f32 %v196, 0.5
    %199 = vrot.lane.b32.xlu0 %v193, 32
    %v200 = vpop.permute.xlu0 %199
    %v202 = vmul.f32 %v197, %v200
    %204 = vrot.lane.b32.xlu0 %v202, 64
    %v205 = vpop.permute.xlu0 %204
    %v207 = vadd.f32 %v193, %v205
    %v208 = vtanh.pop %v207
    %v209 = vsub.f32 1.0, %v197
    %211 = vrot.lane.b32.xlu0 %v208, 96
    %v212 = vpop.permute.xlu0 %211
    %v214 = vmul.f32 %v209, %v212
    %v215 = vmul.f32 %v197, 0.0
    %v216 = vadd.f32 %v214, %v215
    %218 = vrot.lane.b32.xlu0 %v216, 96
    %v219 = vpop.permute.xlu0 %218
    %v221 = vsel %vm175, %v219, 0.0
    %v222 = vpack.c.bf16 %v221, %v221
    %v231 = vunpack.c.l.b16 %v39
    %v232 = vunpack.c.l.b16 %v40
    %v233 = vunpack.c.l.b16 %v41
    %v234 = vunpack.c.l.b16 %v42
    %v235 = vunpack.c.l.b16 %v43
    %v236 = vunpack.c.l.b16 %v44
    %v237 = vunpack.c.l.b16 %v45
    %v238 = vunpack.c.l.b16 %v46
    %v239 = vpack.c.b16 %v232, %v231
    %v240 = vpack.c.b16 %v234, %v233
    %v241 = vpack.c.b16 %v236, %v235
    %v242 = vpack.c.b16 %v238, %v237
    %vm247 = vcmask 523264
    %v249 = vsel %vm247, %v222, 0
    %251 = vmatpush.bf16.msra.mxu0 0
    %252 = vmatpush.bf16.msra.mxu0 0
    %253 = vmatpush.bf16.msra.mxu0 0
    %254 = vmatpush.bf16.msra.mxu0 0
    %255 = vmatpush.bf16.msra.mxu0 %v242
    %256 = vmatpush.bf16.msra.mxu0 %v241
    %257 = vmatpush.bf16.msra.mxu0 %v240
    %258 = vmatpush.bf16.msra.mxu0 %v239
    %259 = vmatmul.bf16.gmra.mxu0 %v249
    %v260 = vpop.f32.mrf.mxu0
    %v261 = vadd.f32 0.0, %v260
    %v262 = vpop.f32.mrf.mxu0
    %263 = vdwg.mxu0
    %v264 = vadd.f32 %v261, %v73
    %v265 = vmul.f32 %v264, 0.5
    %v266 = vtanh.pop %v265
    %v267 = vadd.f32 %v266, 1.0
    %v268 = vmul.f32 %v267, 0.5
    %270 = vrot.lane.b32.xlu0 %v264, 32
    %v271 = vpop.permute.xlu0 %270
    %v273 = vmul.f32 %v268, %v271
    %275 = vrot.lane.b32.xlu0 %v273, 64
    %v276 = vpop.permute.xlu0 %275
    %v278 = vadd.f32 %v264, %v276
    %v279 = vtanh.pop %v278
    %v280 = vsub.f32 1.0, %v268
    %282 = vrot.lane.b32.xlu0 %v279, 96
    %v283 = vpop.permute.xlu0 %282
    %v285 = vmul.f32 %v280, %v283
    %v286 = vmul.f32 %v268, 0.0
    %v287 = vadd.f32 %v285, %v286
    %v288 = vpack.c.bf16 %v216, %v216
    %290 = vrot.lane.b32.xlu0 %v288, 96
    %v291 = vpop.permute.xlu0 %290
    %v293 = vsel %vm175, %v291, 0
    %295 = vmatpush.bf16.msra.mxu0 0
    %296 = vmatpush.bf16.msra.mxu0 0
    %297 = vmatpush.bf16.msra.mxu0 0
    %298 = vmatpush.bf16.msra.mxu0 0
    %299 = vmatpush.bf16.msra.mxu0 0
    %300 = vmatpush.bf16.msra.mxu0 0
    %301 = vmatpush.bf16.msra.mxu0 %v172
    %302 = vmatpush.bf16.msra.mxu0 %v171
    %303 = vmatmul.bf16.gmra.mxu0 %v293
    %v304 = vpop.f32.mrf.mxu0
    %v305 = vadd.f32 0.0, %v304
    %v306 = vpop.f32.mrf.mxu0
    %307 = vdwg.mxu0
    %v308 = vadd.f32 %v146, %v305
    %v309 = vadd.f32 %v308, %v68
    %v310 = vmul.f32 %v309, 0.5
    %v311 = vtanh.pop %v310
    %v312 = vadd.f32 %v311, 1.0
    %v313 = vmul.f32 %v312, 0.5
    %315 = vrot.lane.b32.xlu0 %v309, 32
    %v316 = vpop.permute.xlu0 %315
    %v318 = vmul.f32 %v313, %v316
    %320 = vrot.lane.b32.xlu0 %v318, 64
    %v321 = vpop.permute.xlu0 %320
    %v323 = vadd.f32 %v309, %v321
    %v324 = vtanh.pop %v323
    %v325 = vsub.f32 1.0, %v313
    %327 = vrot.lane.b32.xlu0 %v324, 96
    %v328 = vpop.permute.xlu0 %327
    %v330 = vmul.f32 %v325, %v328
    %v331 = vmul.f32 %v313, %v216
    %v332 = vadd.f32 %v330, %v331
    %334 = vrot.lane.b32.xlu0 %v332, 96
    %v335 = vpop.permute.xlu0 %334
    %v337 = vsel %vm175, %v335, %v287
    %v338 = vpack.c.bf16 %v337, %v337
    %v340 = vsel %vm247, %v338, 0
    %342 = vmatpush.bf16.msra.mxu0 0
    %343 = vmatpush.bf16.msra.mxu0 0
    %344 = vmatpush.bf16.msra.mxu0 0
    %345 = vmatpush.bf16.msra.mxu0 0
    %346 = vmatpush.bf16.msra.mxu0 %v242
    %347 = vmatpush.bf16.msra.mxu0 %v241
    %348 = vmatpush.bf16.msra.mxu0 %v240
    %349 = vmatpush.bf16.msra.mxu0 %v239
    %350 = vmatmul.bf16.gmra.mxu0 %v340
    %v351 = vpop.f32.mrf.mxu0
    %v352 = vadd.f32 0.0, %v351
    %v353 = vpop.f32.mrf.mxu0
    %354 = vdwg.mxu0
    %v355 = vadd.f32 %v352, %v73
    %v356 = vmul.f32 %v355, 0.5
    %v357 = vtanh.pop %v356
    %v358 = vadd.f32 %v357, 1.0
    %v359 = vmul.f32 %v358, 0.5
    %361 = vrot.lane.b32.xlu0 %v355, 32
    %v362 = vpop.permute.xlu0 %361
    %v364 = vmul.f32 %v359, %v362
    %366 = vrot.lane.b32.xlu0 %v364, 64
    %v367 = vpop.permute.xlu0 %366
    %v369 = vadd.f32 %v355, %v367
    %v370 = vtanh.pop %v369
    %v371 = vsub.f32 1.0, %v359
    %373 = vrot.lane.b32.xlu0 %v370, 96
    %v374 = vpop.permute.xlu0 %373
    %v376 = vmul.f32 %v371, %v374
    %v377 = vmul.f32 %v359, %v287
    %v378 = vadd.f32 %v376, %v377
    %v379 = vpack.c.bf16 %v332, %v332
    %381 = vrot.lane.b32.xlu0 %v379, 96
    %v382 = vpop.permute.xlu0 %381
    %v384 = vsel %vm175, %v382, 0
    %386 = vmatpush.bf16.msra.mxu0 0
    %387 = vmatpush.bf16.msra.mxu0 0
    %388 = vmatpush.bf16.msra.mxu0 0
    %389 = vmatpush.bf16.msra.mxu0 0
    %390 = vmatpush.bf16.msra.mxu0 0
    %391 = vmatpush.bf16.msra.mxu0 0
    %392 = vmatpush.bf16.msra.mxu0 %v172
    %393 = vmatpush.bf16.msra.mxu0 %v171
    %394 = vmatmul.bf16.gmra.mxu0 %v384
    %v395 = vpop.f32.mrf.mxu0
    %v396 = vadd.f32 0.0, %v395
    %v397 = vpop.f32.mrf.mxu0
    %398 = vdwg.mxu0
    %v399 = vadd.f32 %v149, %v396
    %v400 = vadd.f32 %v399, %v68
    %v401 = vmul.f32 %v400, 0.5
    %v402 = vtanh.pop %v401
    %v403 = vadd.f32 %v402, 1.0
    %v404 = vmul.f32 %v403, 0.5
    %406 = vrot.lane.b32.xlu0 %v400, 32
    %v407 = vpop.permute.xlu0 %406
    %v409 = vmul.f32 %v404, %v407
    %411 = vrot.lane.b32.xlu0 %v409, 64
    %v412 = vpop.permute.xlu0 %411
    %v414 = vadd.f32 %v400, %v412
    %v415 = vtanh.pop %v414
    %v416 = vsub.f32 1.0, %v404
    %418 = vrot.lane.b32.xlu0 %v415, 96
    %v419 = vpop.permute.xlu0 %418
    %v421 = vmul.f32 %v416, %v419
    %v422 = vmul.f32 %v404, %v332
    %v423 = vadd.f32 %v421, %v422
    %425 = vrot.lane.b32.xlu0 %v423, 96
    %v426 = vpop.permute.xlu0 %425
    %v428 = vsel %vm175, %v426, %v378
    %v429 = vpack.c.bf16 %v428, %v428
    %v431 = vsel %vm247, %v429, 0
    %433 = vmatpush.bf16.msra.mxu0 0
    %434 = vmatpush.bf16.msra.mxu0 0
    %435 = vmatpush.bf16.msra.mxu0 0
    %436 = vmatpush.bf16.msra.mxu0 0
    %437 = vmatpush.bf16.msra.mxu0 %v242
    %438 = vmatpush.bf16.msra.mxu0 %v241
    %439 = vmatpush.bf16.msra.mxu0 %v240
    %440 = vmatpush.bf16.msra.mxu0 %v239
    %441 = vmatmul.bf16.gmra.mxu0 %v431
    %v442 = vpop.f32.mrf.mxu0
    %v443 = vadd.f32 0.0, %v442
    %v444 = vpop.f32.mrf.mxu0
    %445 = vdwg.mxu0
    %v446 = vadd.f32 %v443, %v73
    %v447 = vmul.f32 %v446, 0.5
    %v448 = vtanh.pop %v447
    %v449 = vadd.f32 %v448, 1.0
    %v450 = vmul.f32 %v449, 0.5
    %452 = vrot.lane.b32.xlu0 %v446, 32
    %v453 = vpop.permute.xlu0 %452
    %v455 = vmul.f32 %v450, %v453
    %457 = vrot.lane.b32.xlu0 %v455, 64
    %v458 = vpop.permute.xlu0 %457
    %v460 = vadd.f32 %v446, %v458
    %v461 = vtanh.pop %v460
    %v462 = vsub.f32 1.0, %v450
    %464 = vrot.lane.b32.xlu0 %v461, 96
    %v465 = vpop.permute.xlu0 %464
    %v467 = vmul.f32 %v462, %v465
    %v468 = vmul.f32 %v450, %v378
    %v469 = vadd.f32 %v467, %v468
    %v470 = vpack.c.bf16 %v423, %v423
    %472 = vrot.lane.b32.xlu0 %v470, 96
    %v473 = vpop.permute.xlu0 %472
    %v475 = vsel %vm175, %v473, 0
    %477 = vmatpush.bf16.msra.mxu0 0
    %478 = vmatpush.bf16.msra.mxu0 0
    %479 = vmatpush.bf16.msra.mxu0 0
    %480 = vmatpush.bf16.msra.mxu0 0
    %481 = vmatpush.bf16.msra.mxu0 0
    %482 = vmatpush.bf16.msra.mxu0 0
    %483 = vmatpush.bf16.msra.mxu0 %v172
    %484 = vmatpush.bf16.msra.mxu0 %v171
    %485 = vmatmul.bf16.gmra.mxu0 %v475
    %v486 = vpop.f32.mrf.mxu0
    %v487 = vadd.f32 0.0, %v486
    %v488 = vpop.f32.mrf.mxu0
    %489 = vdwg.mxu0
    %v490 = vadd.f32 %v151, %v487
    %v491 = vadd.f32 %v490, %v68
    %v492 = vmul.f32 %v491, 0.5
    %v493 = vtanh.pop %v492
    %v494 = vadd.f32 %v493, 1.0
    %v495 = vmul.f32 %v494, 0.5
    %497 = vrot.lane.b32.xlu0 %v491, 32
    %v498 = vpop.permute.xlu0 %497
    %v500 = vmul.f32 %v495, %v498
    %502 = vrot.lane.b32.xlu0 %v500, 64
    %v503 = vpop.permute.xlu0 %502
    %v505 = vadd.f32 %v491, %v503
    %v506 = vtanh.pop %v505
    %v507 = vsub.f32 1.0, %v495
    %509 = vrot.lane.b32.xlu0 %v506, 96
    %v510 = vpop.permute.xlu0 %509
    %v512 = vmul.f32 %v507, %v510
    %v513 = vmul.f32 %v495, %v423
    %v514 = vadd.f32 %v512, %v513
    %516 = vrot.lane.b32.xlu0 %v514, 96
    %v517 = vpop.permute.xlu0 %516
    %v519 = vsel %vm175, %v517, %v469
    %v520 = vpack.c.bf16 %v519, %v519
    %v522 = vsel %vm247, %v520, 0
    %524 = vmatpush.bf16.msra.mxu0 0
    %525 = vmatpush.bf16.msra.mxu0 0
    %526 = vmatpush.bf16.msra.mxu0 0
    %527 = vmatpush.bf16.msra.mxu0 0
    %528 = vmatpush.bf16.msra.mxu0 %v242
    %529 = vmatpush.bf16.msra.mxu0 %v241
    %530 = vmatpush.bf16.msra.mxu0 %v240
    %531 = vmatpush.bf16.msra.mxu0 %v239
    %532 = vmatmul.bf16.gmra.mxu0 %v522
    %v533 = vpop.f32.mrf.mxu0
    %v534 = vadd.f32 0.0, %v533
    %v535 = vpop.f32.mrf.mxu0
    %536 = vdwg.mxu0
    %v537 = vadd.f32 %v534, %v73
    %v538 = vmul.f32 %v537, 0.5
    %v539 = vtanh.pop %v538
    %v540 = vadd.f32 %v539, 1.0
    %v541 = vmul.f32 %v540, 0.5
    %543 = vrot.lane.b32.xlu0 %v537, 32
    %v544 = vpop.permute.xlu0 %543
    %v546 = vmul.f32 %v541, %v544
    %548 = vrot.lane.b32.xlu0 %v546, 64
    %v549 = vpop.permute.xlu0 %548
    %v551 = vadd.f32 %v537, %v549
    %v552 = vtanh.pop %v551
    %v553 = vsub.f32 1.0, %v541
    %555 = vrot.lane.b32.xlu0 %v552, 96
    %v556 = vpop.permute.xlu0 %555
    %v558 = vmul.f32 %v553, %v556
    %v559 = vmul.f32 %v541, %v469
    %v560 = vadd.f32 %v558, %v559
    %v561 = vpack.c.bf16 %v514, %v514
    %563 = vrot.lane.b32.xlu0 %v561, 96
    %v564 = vpop.permute.xlu0 %563
    %v566 = vsel %vm175, %v564, 0
    %568 = vmatpush.bf16.msra.mxu0 0
    %569 = vmatpush.bf16.msra.mxu0 0
    %570 = vmatpush.bf16.msra.mxu0 0
    %571 = vmatpush.bf16.msra.mxu0 0
    %572 = vmatpush.bf16.msra.mxu0 0
    %573 = vmatpush.bf16.msra.mxu0 0
    %574 = vmatpush.bf16.msra.mxu0 %v172
    %575 = vmatpush.bf16.msra.mxu0 %v171
    %576 = vmatmul.bf16.gmra.mxu0 %v566
    %v577 = vpop.f32.mrf.mxu0
    %v578 = vadd.f32 0.0, %v577
    %v579 = vpop.f32.mrf.mxu0
    %580 = vdwg.mxu0
    %v581 = vadd.f32 %v154, %v578
    %v582 = vadd.f32 %v581, %v68
    %v583 = vmul.f32 %v582, 0.5
    %v584 = vtanh.pop %v583
    %v585 = vadd.f32 %v584, 1.0
    %v586 = vmul.f32 %v585, 0.5
    %588 = vrot.lane.b32.xlu0 %v582, 32
    %v589 = vpop.permute.xlu0 %588
    %v591 = vmul.f32 %v586, %v589
    %593 = vrot.lane.b32.xlu0 %v591, 64
    %v594 = vpop.permute.xlu0 %593
    %v596 = vadd.f32 %v582, %v594
    %v597 = vtanh.pop %v596
    %v598 = vsub.f32 1.0, %v586
    %600 = vrot.lane.b32.xlu0 %v597, 96
    %v601 = vpop.permute.xlu0 %600
    %v603 = vmul.f32 %v598, %v601
    %v604 = vmul.f32 %v586, %v514
    %v605 = vadd.f32 %v603, %v604
    %607 = vrot.lane.b32.xlu0 %v605, 96
    %v608 = vpop.permute.xlu0 %607
    %v610 = vsel %vm175, %v608, %v560
    %v611 = vpack.c.bf16 %v610, %v610
    %v613 = vsel %vm247, %v611, 0
    %615 = vmatpush.bf16.msra.mxu0 0
    %616 = vmatpush.bf16.msra.mxu0 0
    %617 = vmatpush.bf16.msra.mxu0 0
    %618 = vmatpush.bf16.msra.mxu0 0
    %619 = vmatpush.bf16.msra.mxu0 %v242
    %620 = vmatpush.bf16.msra.mxu0 %v241
    %621 = vmatpush.bf16.msra.mxu0 %v240
    %622 = vmatpush.bf16.msra.mxu0 %v239
    %623 = vmatmul.bf16.gmra.mxu0 %v613
    %v624 = vpop.f32.mrf.mxu0
    %v625 = vadd.f32 0.0, %v624
    %v626 = vpop.f32.mrf.mxu0
    %627 = vdwg.mxu0
    %v628 = vadd.f32 %v625, %v73
    %v629 = vmul.f32 %v628, 0.5
    %v630 = vtanh.pop %v629
    %v631 = vadd.f32 %v630, 1.0
    %v632 = vmul.f32 %v631, 0.5
    %634 = vrot.lane.b32.xlu0 %v628, 32
    %v635 = vpop.permute.xlu0 %634
    %v637 = vmul.f32 %v632, %v635
    %639 = vrot.lane.b32.xlu0 %v637, 64
    %v640 = vpop.permute.xlu0 %639
    %v642 = vadd.f32 %v628, %v640
    %v643 = vtanh.pop %v642
    %v644 = vsub.f32 1.0, %v632
    %646 = vrot.lane.b32.xlu0 %v643, 96
    %v647 = vpop.permute.xlu0 %646
    %v649 = vmul.f32 %v644, %v647
    %v650 = vmul.f32 %v632, %v560
    %v651 = vadd.f32 %v649, %v650
    %v652 = vpack.c.bf16 %v605, %v605
    %654 = vrot.lane.b32.xlu0 %v652, 96
    %v655 = vpop.permute.xlu0 %654
    %v657 = vsel %vm175, %v655, 0
    %659 = vmatpush.bf16.msra.mxu0 0
    %660 = vmatpush.bf16.msra.mxu0 0
    %661 = vmatpush.bf16.msra.mxu0 0
    %662 = vmatpush.bf16.msra.mxu0 0
    %663 = vmatpush.bf16.msra.mxu0 0
    %664 = vmatpush.bf16.msra.mxu0 0
    %665 = vmatpush.bf16.msra.mxu0 %v172
    %666 = vmatpush.bf16.msra.mxu0 %v171
    %667 = vmatmul.bf16.gmra.mxu0 %v657
    %v668 = vpop.f32.mrf.mxu0
    %v669 = vadd.f32 0.0, %v668
    %v670 = vpop.f32.mrf.mxu0
    %671 = vdwg.mxu0
    %v672 = vadd.f32 %v156, %v669
    %v673 = vadd.f32 %v672, %v68
    %v674 = vmul.f32 %v673, 0.5
    %v675 = vtanh.pop %v674
    %v676 = vadd.f32 %v675, 1.0
    %v677 = vmul.f32 %v676, 0.5
    %679 = vrot.lane.b32.xlu0 %v673, 32
    %v680 = vpop.permute.xlu0 %679
    %v682 = vmul.f32 %v677, %v680
    %684 = vrot.lane.b32.xlu0 %v682, 64
    %v685 = vpop.permute.xlu0 %684
    %v687 = vadd.f32 %v673, %v685
    %v688 = vtanh.pop %v687
    %v689 = vsub.f32 1.0, %v677
    %691 = vrot.lane.b32.xlu0 %v688, 96
    %v692 = vpop.permute.xlu0 %691
    %v694 = vmul.f32 %v689, %v692
    %v695 = vmul.f32 %v677, %v605
    %v696 = vadd.f32 %v694, %v695
    %698 = vrot.lane.b32.xlu0 %v696, 96
    %v699 = vpop.permute.xlu0 %698
    %v701 = vsel %vm175, %v699, %v651
    %v702 = vpack.c.bf16 %v701, %v701
    %v704 = vsel %vm247, %v702, 0
    %706 = vmatpush.bf16.msra.mxu0 0
    %707 = vmatpush.bf16.msra.mxu0 0
    %708 = vmatpush.bf16.msra.mxu0 0
    %709 = vmatpush.bf16.msra.mxu0 0
    %710 = vmatpush.bf16.msra.mxu0 %v242
    %711 = vmatpush.bf16.msra.mxu0 %v241
    %712 = vmatpush.bf16.msra.mxu0 %v240
    %713 = vmatpush.bf16.msra.mxu0 %v239
    %714 = vmatmul.bf16.gmra.mxu0 %v704
    %v715 = vpop.f32.mrf.mxu0
    %v716 = vadd.f32 0.0, %v715
    %v717 = vpop.f32.mrf.mxu0
    %718 = vdwg.mxu0
    %v719 = vadd.f32 %v716, %v73
    %v720 = vmul.f32 %v719, 0.5
    %v721 = vtanh.pop %v720
    %v722 = vadd.f32 %v721, 1.0
    %v723 = vmul.f32 %v722, 0.5
    %725 = vrot.lane.b32.xlu0 %v719, 32
    %v726 = vpop.permute.xlu0 %725
    %v728 = vmul.f32 %v723, %v726
    %730 = vrot.lane.b32.xlu0 %v728, 64
    %v731 = vpop.permute.xlu0 %730
    %v733 = vadd.f32 %v719, %v731
    %v734 = vtanh.pop %v733
    %v735 = vsub.f32 1.0, %v723
    %737 = vrot.lane.b32.xlu0 %v734, 96
    %v738 = vpop.permute.xlu0 %737
    %v740 = vmul.f32 %v735, %v738
    %v741 = vmul.f32 %v723, %v651
    %v742 = vadd.f32 %v740, %v741
    %v743 = vpack.c.bf16 %v696, %v696
    %745 = vrot.lane.b32.xlu0 %v743, 96
    %v746 = vpop.permute.xlu0 %745
    %v748 = vsel %vm175, %v746, 0
    %750 = vmatpush.bf16.msra.mxu0 0
    %751 = vmatpush.bf16.msra.mxu0 0
    %752 = vmatpush.bf16.msra.mxu0 0
    %753 = vmatpush.bf16.msra.mxu0 0
    %754 = vmatpush.bf16.msra.mxu0 0
    %755 = vmatpush.bf16.msra.mxu0 0
    %756 = vmatpush.bf16.msra.mxu0 %v172
    %757 = vmatpush.bf16.msra.mxu0 %v171
    %758 = vmatmul.bf16.gmra.mxu0 %v748
    %v759 = vpop.f32.mrf.mxu0
    %v760 = vadd.f32 0.0, %v759
    %v761 = vpop.f32.mrf.mxu0
    %762 = vdwg.mxu0
    %v763 = vadd.f32 %v159, %v760
    %v764 = vadd.f32 %v763, %v68
    %v765 = vmul.f32 %v764, 0.5
    %v766 = vtanh.pop %v765
    %v767 = vadd.f32 %v766, 1.0
    %v768 = vmul.f32 %v767, 0.5
    %770 = vrot.lane.b32.xlu0 %v764, 32
    %v771 = vpop.permute.xlu0 %770
    %v773 = vmul.f32 %v768, %v771
    %775 = vrot.lane.b32.xlu0 %v773, 64
    %v776 = vpop.permute.xlu0 %775
    %v778 = vadd.f32 %v764, %v776
    %v779 = vtanh.pop %v778
    %v780 = vsub.f32 1.0, %v768
    %782 = vrot.lane.b32.xlu0 %v779, 96
    %v783 = vpop.permute.xlu0 %782
    %v785 = vmul.f32 %v780, %v783
    %v786 = vmul.f32 %v768, %v696
    %v787 = vadd.f32 %v785, %v786
    %789 = vrot.lane.b32.xlu0 %v787, 96
    %v790 = vpop.permute.xlu0 %789
    %v792 = vsel %vm175, %v790, %v742
    %v793 = vpack.c.bf16 %v792, %v792
    %v795 = vsel %vm247, %v793, 0
    %797 = vmatpush.bf16.msra.mxu0 0
    %798 = vmatpush.bf16.msra.mxu0 0
    %799 = vmatpush.bf16.msra.mxu0 0
    %800 = vmatpush.bf16.msra.mxu0 0
    %801 = vmatpush.bf16.msra.mxu0 %v242
    %802 = vmatpush.bf16.msra.mxu0 %v241
    %803 = vmatpush.bf16.msra.mxu0 %v240
    %804 = vmatpush.bf16.msra.mxu0 %v239
    %805 = vmatmul.bf16.gmra.mxu0 %v795
    %v806 = vpop.f32.mrf.mxu0
    %v807 = vadd.f32 0.0, %v806
    %v808 = vpop.f32.mrf.mxu0
    %809 = vdwg.mxu0
    %v810 = vadd.f32 %v807, %v73
    %v811 = vmul.f32 %v810, 0.5
    %v812 = vtanh.pop %v811
    %v813 = vadd.f32 %v812, 1.0
    %v814 = vmul.f32 %v813, 0.5
    %816 = vrot.lane.b32.xlu0 %v810, 32
    %v817 = vpop.permute.xlu0 %816
    %v819 = vmul.f32 %v814, %v817
    %821 = vrot.lane.b32.xlu0 %v819, 64
    %v822 = vpop.permute.xlu0 %821
    %v824 = vadd.f32 %v810, %v822
    %v825 = vtanh.pop %v824
    %v826 = vsub.f32 1.0, %v814
    %828 = vrot.lane.b32.xlu0 %v825, 96
    %v829 = vpop.permute.xlu0 %828
    %v831 = vmul.f32 %v826, %v829
    %v832 = vmul.f32 %v814, %v742
    %v833 = vadd.f32 %v831, %v832
    %v834 = vpack.c.bf16 %v787, %v787
    %836 = vrot.lane.b32.xlu0 %v834, 96
    %v837 = vpop.permute.xlu0 %836
    %v839 = vsel %vm175, %v837, 0
    %841 = vmatpush.bf16.msra.mxu0 0
    %842 = vmatpush.bf16.msra.mxu0 0
    %843 = vmatpush.bf16.msra.mxu0 0
    %844 = vmatpush.bf16.msra.mxu0 0
    %845 = vmatpush.bf16.msra.mxu0 0
    %846 = vmatpush.bf16.msra.mxu0 0
    %847 = vmatpush.bf16.msra.mxu0 %v172
    %848 = vmatpush.bf16.msra.mxu0 %v171
    %849 = vmatmul.bf16.gmra.mxu0 %v839
    %v850 = vpop.f32.mrf.mxu0
    %v851 = vadd.f32 0.0, %v850
    %v852 = vpop.f32.mrf.mxu0
    %853 = vdwg.mxu0
    %v854 = vadd.f32 %v161, %v851
    %v855 = vadd.f32 %v854, %v68
    %v856 = vmul.f32 %v855, 0.5
    %v857 = vtanh.pop %v856
    %v858 = vadd.f32 %v857, 1.0
    %v859 = vmul.f32 %v858, 0.5
    %861 = vrot.lane.b32.xlu0 %v855, 32
    %v862 = vpop.permute.xlu0 %861
    %v864 = vmul.f32 %v859, %v862
    %866 = vrot.lane.b32.xlu0 %v864, 64
    %v867 = vpop.permute.xlu0 %866
    %v869 = vadd.f32 %v855, %v867
    %v870 = vtanh.pop %v869
    %v871 = vsub.f32 1.0, %v859
    %873 = vrot.lane.b32.xlu0 %v870, 96
    %v874 = vpop.permute.xlu0 %873
    %v876 = vmul.f32 %v871, %v874
    %v877 = vmul.f32 %v859, %v787
    %v878 = vadd.f32 %v876, %v877
    %880 = vrot.lane.b32.xlu0 %v878, 96
    %v881 = vpop.permute.xlu0 %880
    %v883 = vsel %vm175, %v881, %v833
    %v884 = vpack.c.bf16 %v883, %v883
    %v886 = vsel %vm247, %v884, 0
    %888 = vmatpush.bf16.msra.mxu0 0
    %889 = vmatpush.bf16.msra.mxu0 0
    %890 = vmatpush.bf16.msra.mxu0 0
    %891 = vmatpush.bf16.msra.mxu0 0
    %892 = vmatpush.bf16.msra.mxu0 %v242
    %893 = vmatpush.bf16.msra.mxu0 %v241
    %894 = vmatpush.bf16.msra.mxu0 %v240
    %895 = vmatpush.bf16.msra.mxu0 %v239
    %896 = vmatmul.bf16.gmra.mxu0 %v886
    %v897 = vpop.f32.mrf.mxu0
    %v898 = vadd.f32 0.0, %v897
    %v899 = vpop.f32.mrf.mxu0
    %900 = vdwg.mxu0
    %v901 = vadd.f32 %v898, %v73
    %v902 = vmul.f32 %v901, 0.5
    %v903 = vtanh.pop %v902
    %v904 = vadd.f32 %v903, 1.0
    %v905 = vmul.f32 %v904, 0.5
    %907 = vrot.lane.b32.xlu0 %v901, 32
    %v908 = vpop.permute.xlu0 %907
    %v910 = vmul.f32 %v905, %v908
    %912 = vrot.lane.b32.xlu0 %v910, 64
    %v913 = vpop.permute.xlu0 %912
    %v915 = vadd.f32 %v901, %v913
    %v916 = vtanh.pop %v915
    %v917 = vsub.f32 1.0, %v905
    %919 = vrot.lane.b32.xlu0 %v916, 96
    %v920 = vpop.permute.xlu0 %919
    %v922 = vmul.f32 %v917, %v920
    %v923 = vmul.f32 %v905, %v833
    %v924 = vadd.f32 %v922, %v923
    %v925 = vpack.c.bf16 %v878, %v878
    %927 = vrot.lane.b32.xlu0 %v925, 96
    %v928 = vpop.permute.xlu0 %927
    %v933 = vunpack.c.l.b16 %v48
    %v934 = vunpack.c.l.b16 %v49
    %v935 = vunpack.c.l.b16 %v50
    %v936 = vunpack.c.l.b16 %v51
    %v937 = vpack.c.b16 %v934, %v933
    %v938 = vpack.c.b16 %v936, %v935
    %v942 = vsel %vm175, %v928, 0
    %944 = vmatpush.bf16.msra.mxu0 0
    %945 = vmatpush.bf16.msra.mxu0 0
    %946 = vmatpush.bf16.msra.mxu0 0
    %947 = vmatpush.bf16.msra.mxu0 0
    %948 = vmatpush.bf16.msra.mxu0 0
    %949 = vmatpush.bf16.msra.mxu0 0
    %950 = vmatpush.bf16.msra.mxu0 %v938
    %951 = vmatpush.bf16.msra.mxu0 %v937
    %952 = vmatmul.bf16.gmra.mxu0 %v942
    %v953 = vpop.f32.mrf.mxu0
    %v954 = vadd.f32 0.0, %v953
    %v955 = vpop.f32.mrf.mxu0
    %956 = vdwg.mxu0
    %v957 = vadd.f32 %v954, %v78
    %v958 = vmul.f32 %v957, 0.5
    %v959 = vtanh.pop %v958
    %v960 = vadd.f32 %v959, 1.0
    %v961 = vmul.f32 %v960, 0.5
    %963 = vrot.lane.b32.xlu0 %v957, 32
    %v964 = vpop.permute.xlu0 %963
    %v966 = vmul.f32 %v961, %v964
    %968 = vrot.lane.b32.xlu0 %v966, 64
    %v969 = vpop.permute.xlu0 %968
    %v971 = vadd.f32 %v957, %v969
    %v972 = vtanh.pop %v971
    %v973 = vsub.f32 1.0, %v961
    %975 = vrot.lane.b32.xlu0 %v972, 96
    %v976 = vpop.permute.xlu0 %975
    %v978 = vmul.f32 %v973, %v976
    %v979 = vmul.f32 %v961, %v878
    %v980 = vadd.f32 %v978, %v979
    %982 = vrot.lane.b32.xlu0 %v980, 96
    %v983 = vpop.permute.xlu0 %982
    %v985 = vsel %vm175, %v983, %v924
    %v986 = vpack.c.bf16 %v985, %v985
    %v995 = vunpack.c.l.b16 %v53
    %v996 = vunpack.c.l.b16 %v54
    %v997 = vunpack.c.l.b16 %v55
    %v998 = vunpack.c.l.b16 %v56
    %v999 = vunpack.c.l.b16 %v57
    %v1000 = vunpack.c.l.b16 %v58
    %v1001 = vunpack.c.l.b16 %v59
    %v1002 = vunpack.c.l.b16 %v60
    %v1003 = vpack.c.b16 %v996, %v995
    %v1004 = vpack.c.b16 %v998, %v997
    %v1005 = vpack.c.b16 %v1000, %v999
    %v1006 = vpack.c.b16 %v1002, %v1001
    %v1012 = vsel %vm247, %v986, 0
    %1014 = vmatpush.bf16.msra.mxu0 0
    %1015 = vmatpush.bf16.msra.mxu0 0
    %1016 = vmatpush.bf16.msra.mxu0 0
    %1017 = vmatpush.bf16.msra.mxu0 0
    %1018 = vmatpush.bf16.msra.mxu0 %v1006
    %1019 = vmatpush.bf16.msra.mxu0 %v1005
    %1020 = vmatpush.bf16.msra.mxu0 %v1004
    %1021 = vmatpush.bf16.msra.mxu0 %v1003
    %1022 = vmatmul.bf16.gmra.mxu0 %v1012
    %v1023 = vpop.f32.mrf.mxu0
    %v1024 = vadd.f32 0.0, %v1023
    %v1025 = vpop.f32.mrf.mxu0
    %1026 = vdwg.mxu0
    %v1027 = vadd.f32 %v1024, %v83
    %v1028 = vmul.f32 %v1027, 0.5
    %v1029 = vtanh.pop %v1028
    %v1030 = vadd.f32 %v1029, 1.0
    %v1031 = vmul.f32 %v1030, 0.5
    %1033 = vrot.lane.b32.xlu0 %v1027, 32
    %v1034 = vpop.permute.xlu0 %1033
    %v1036 = vmul.f32 %v1031, %v1034
    %1038 = vrot.lane.b32.xlu0 %v1036, 64
    %v1039 = vpop.permute.xlu0 %1038
    %v1041 = vadd.f32 %v1027, %v1039
    %v1042 = vtanh.pop %v1041
    %v1043 = vsub.f32 1.0, %v1031
    %1045 = vrot.lane.b32.xlu0 %v1042, 96
    %v1046 = vpop.permute.xlu0 %1045
    %v1048 = vmul.f32 %v1043, %v1046
    %v1049 = vmul.f32 %v1031, %v924
    %v1050 = vadd.f32 %v1048, %v1049
    %v1051 = vpack.c.bf16 %v980, %v980
    %1053 = vrot.lane.b32.xlu0 %v1051, 96
    %v1054 = vpop.permute.xlu0 %1053
    %v1056 = vsel %vm175, %v1054, 0
    %1058 = vmatpush.bf16.msra.mxu0 0
    %1059 = vmatpush.bf16.msra.mxu0 0
    %1060 = vmatpush.bf16.msra.mxu0 0
    %1061 = vmatpush.bf16.msra.mxu0 0
    %1062 = vmatpush.bf16.msra.mxu0 0
    %1063 = vmatpush.bf16.msra.mxu0 0
    %1064 = vmatpush.bf16.msra.mxu0 %v938
    %1065 = vmatpush.bf16.msra.mxu0 %v937
    %1066 = vmatmul.bf16.gmra.mxu0 %v1056
    %v1067 = vpop.f32.mrf.mxu0
    %v1068 = vadd.f32 0.0, %v1067
    %v1069 = vpop.f32.mrf.mxu0
    %1070 = vdwg.mxu0
    %v1071 = vadd.f32 %v1068, %v78
    %v1072 = vmul.f32 %v1071, 0.5
    %v1073 = vtanh.pop %v1072
    %v1074 = vadd.f32 %v1073, 1.0
    %v1075 = vmul.f32 %v1074, 0.5
    %1077 = vrot.lane.b32.xlu0 %v1071, 32
    %v1078 = vpop.permute.xlu0 %1077
    %v1080 = vmul.f32 %v1075, %v1078
    %1082 = vrot.lane.b32.xlu0 %v1080, 64
    %v1083 = vpop.permute.xlu0 %1082
    %v1085 = vadd.f32 %v1071, %v1083
    %v1086 = vtanh.pop %v1085
    %v1087 = vsub.f32 1.0, %v1075
    %1089 = vrot.lane.b32.xlu0 %v1086, 96
    %v1090 = vpop.permute.xlu0 %1089
    %v1092 = vmul.f32 %v1087, %v1090
    %v1093 = vmul.f32 %v1075, %v980
    %v1094 = vadd.f32 %v1092, %v1093
    %1096 = vrot.lane.b32.xlu0 %v1094, 96
    %v1097 = vpop.permute.xlu0 %1096
    %v1099 = vsel %vm175, %v1097, %v1050
    %v1100 = vpack.c.bf16 %v1099, %v1099
    %v1102 = vsel %vm247, %v1100, 0
    %1104 = vmatpush.bf16.msra.mxu0 0
    %1105 = vmatpush.bf16.msra.mxu0 0
    %1106 = vmatpush.bf16.msra.mxu0 0
    %1107 = vmatpush.bf16.msra.mxu0 0
    %1108 = vmatpush.bf16.msra.mxu0 %v1006
    %1109 = vmatpush.bf16.msra.mxu0 %v1005
    %1110 = vmatpush.bf16.msra.mxu0 %v1004
    %1111 = vmatpush.bf16.msra.mxu0 %v1003
    %1112 = vmatmul.bf16.gmra.mxu0 %v1102
    %v1113 = vpop.f32.mrf.mxu0
    %v1114 = vadd.f32 0.0, %v1113
    %v1115 = vpop.f32.mrf.mxu0
    %1116 = vdwg.mxu0
    %v1117 = vadd.f32 %v1114, %v83
    %v1118 = vmul.f32 %v1117, 0.5
    %v1119 = vtanh.pop %v1118
    %v1120 = vadd.f32 %v1119, 1.0
    %v1121 = vmul.f32 %v1120, 0.5
    %1123 = vrot.lane.b32.xlu0 %v1117, 32
    %v1124 = vpop.permute.xlu0 %1123
    %v1126 = vmul.f32 %v1121, %v1124
    %1128 = vrot.lane.b32.xlu0 %v1126, 64
    %v1129 = vpop.permute.xlu0 %1128
    %v1131 = vadd.f32 %v1117, %v1129
    %v1132 = vtanh.pop %v1131
    %v1133 = vsub.f32 1.0, %v1121
    %1135 = vrot.lane.b32.xlu0 %v1132, 96
    %v1136 = vpop.permute.xlu0 %1135
    %v1138 = vmul.f32 %v1133, %v1136
    %v1139 = vmul.f32 %v1121, %v1050
    %v1140 = vadd.f32 %v1138, %v1139
    %v1141 = vpack.c.bf16 %v1094, %v1094
    %1143 = vrot.lane.b32.xlu0 %v1141, 96
    %v1144 = vpop.permute.xlu0 %1143
    %v1146 = vsel %vm175, %v1144, 0
    %1148 = vmatpush.bf16.msra.mxu0 0
    %1149 = vmatpush.bf16.msra.mxu0 0
    %1150 = vmatpush.bf16.msra.mxu0 0
    %1151 = vmatpush.bf16.msra.mxu0 0
    %1152 = vmatpush.bf16.msra.mxu0 0
    %1153 = vmatpush.bf16.msra.mxu0 0
    %1154 = vmatpush.bf16.msra.mxu0 %v938
    %1155 = vmatpush.bf16.msra.mxu0 %v937
    %1156 = vmatmul.bf16.gmra.mxu0 %v1146
    %v1157 = vpop.f32.mrf.mxu0
    %v1158 = vadd.f32 0.0, %v1157
    %v1159 = vpop.f32.mrf.mxu0
    %1160 = vdwg.mxu0
    %v1161 = vadd.f32 %v1158, %v78
    %v1162 = vmul.f32 %v1161, 0.5
    %v1163 = vtanh.pop %v1162
    %v1164 = vadd.f32 %v1163, 1.0
    %v1165 = vmul.f32 %v1164, 0.5
    %1167 = vrot.lane.b32.xlu0 %v1161, 32
    %v1168 = vpop.permute.xlu0 %1167
    %v1170 = vmul.f32 %v1165, %v1168
    %1172 = vrot.lane.b32.xlu0 %v1170, 64
    %v1173 = vpop.permute.xlu0 %1172
    %v1175 = vadd.f32 %v1161, %v1173
    %v1176 = vtanh.pop %v1175
    %v1177 = vsub.f32 1.0, %v1165
    %1179 = vrot.lane.b32.xlu0 %v1176, 96
    %v1180 = vpop.permute.xlu0 %1179
    %v1182 = vmul.f32 %v1177, %v1180
    %v1183 = vmul.f32 %v1165, %v1094
    %v1184 = vadd.f32 %v1182, %v1183
    %1186 = vrot.lane.b32.xlu0 %v1184, 96
    %v1187 = vpop.permute.xlu0 %1186
    %v1189 = vsel %vm175, %v1187, %v1140
    %v1190 = vpack.c.bf16 %v1189, %v1189
    %v1192 = vsel %vm247, %v1190, 0
    %1194 = vmatpush.bf16.msra.mxu0 0
    %1195 = vmatpush.bf16.msra.mxu0 0
    %1196 = vmatpush.bf16.msra.mxu0 0
    %1197 = vmatpush.bf16.msra.mxu0 0
    %1198 = vmatpush.bf16.msra.mxu0 %v1006
    %1199 = vmatpush.bf16.msra.mxu0 %v1005
    %1200 = vmatpush.bf16.msra.mxu0 %v1004
    %1201 = vmatpush.bf16.msra.mxu0 %v1003
    %1202 = vmatmul.bf16.gmra.mxu0 %v1192
    %v1203 = vpop.f32.mrf.mxu0
    %v1204 = vadd.f32 0.0, %v1203
    %v1205 = vpop.f32.mrf.mxu0
    %1206 = vdwg.mxu0
    %v1207 = vadd.f32 %v1204, %v83
    %v1208 = vmul.f32 %v1207, 0.5
    %v1209 = vtanh.pop %v1208
    %v1210 = vadd.f32 %v1209, 1.0
    %v1211 = vmul.f32 %v1210, 0.5
    %1213 = vrot.lane.b32.xlu0 %v1207, 32
    %v1214 = vpop.permute.xlu0 %1213
    %v1216 = vmul.f32 %v1211, %v1214
    %1218 = vrot.lane.b32.xlu0 %v1216, 64
    %v1219 = vpop.permute.xlu0 %1218
    %v1221 = vadd.f32 %v1207, %v1219
    %v1222 = vtanh.pop %v1221
    %v1223 = vsub.f32 1.0, %v1211
    %1225 = vrot.lane.b32.xlu0 %v1222, 96
    %v1226 = vpop.permute.xlu0 %1225
    %v1228 = vmul.f32 %v1223, %v1226
    %v1229 = vmul.f32 %v1211, %v1140
    %v1230 = vadd.f32 %v1228, %v1229
    %v1231 = vpack.c.bf16 %v1184, %v1184
    %1233 = vrot.lane.b32.xlu0 %v1231, 96
    %v1234 = vpop.permute.xlu0 %1233
    %v1236 = vsel %vm175, %v1234, 0
    %1238 = vmatpush.bf16.msra.mxu0 0
    %1239 = vmatpush.bf16.msra.mxu0 0
    %1240 = vmatpush.bf16.msra.mxu0 0
    %1241 = vmatpush.bf16.msra.mxu0 0
    %1242 = vmatpush.bf16.msra.mxu0 0
    %1243 = vmatpush.bf16.msra.mxu0 0
    %1244 = vmatpush.bf16.msra.mxu0 %v938
    %1245 = vmatpush.bf16.msra.mxu0 %v937
    %1246 = vmatmul.bf16.gmra.mxu0 %v1236
    %v1247 = vpop.f32.mrf.mxu0
    %v1248 = vadd.f32 0.0, %v1247
    %v1249 = vpop.f32.mrf.mxu0
    %1250 = vdwg.mxu0
    %v1251 = vadd.f32 %v1248, %v78
    %v1252 = vmul.f32 %v1251, 0.5
    %v1253 = vtanh.pop %v1252
    %v1254 = vadd.f32 %v1253, 1.0
    %v1255 = vmul.f32 %v1254, 0.5
    %1257 = vrot.lane.b32.xlu0 %v1251, 32
    %v1258 = vpop.permute.xlu0 %1257
    %v1260 = vmul.f32 %v1255, %v1258
    %1262 = vrot.lane.b32.xlu0 %v1260, 64
    %v1263 = vpop.permute.xlu0 %1262
    %v1265 = vadd.f32 %v1251, %v1263
    %v1266 = vtanh.pop %v1265
    %v1267 = vsub.f32 1.0, %v1255
    %1269 = vrot.lane.b32.xlu0 %v1266, 96
    %v1270 = vpop.permute.xlu0 %1269
    %v1272 = vmul.f32 %v1267, %v1270
    %v1273 = vmul.f32 %v1255, %v1184
    %v1274 = vadd.f32 %v1272, %v1273
    %1276 = vrot.lane.b32.xlu0 %v1274, 96
    %v1277 = vpop.permute.xlu0 %1276
    %v1279 = vsel %vm175, %v1277, %v1230
    %v1280 = vpack.c.bf16 %v1279, %v1279
    %v1282 = vsel %vm247, %v1280, 0
    %1284 = vmatpush.bf16.msra.mxu0 0
    %1285 = vmatpush.bf16.msra.mxu0 0
    %1286 = vmatpush.bf16.msra.mxu0 0
    %1287 = vmatpush.bf16.msra.mxu0 0
    %1288 = vmatpush.bf16.msra.mxu0 %v1006
    %1289 = vmatpush.bf16.msra.mxu0 %v1005
    %1290 = vmatpush.bf16.msra.mxu0 %v1004
    %1291 = vmatpush.bf16.msra.mxu0 %v1003
    %1292 = vmatmul.bf16.gmra.mxu0 %v1282
    %v1293 = vpop.f32.mrf.mxu0
    %v1294 = vadd.f32 0.0, %v1293
    %v1295 = vpop.f32.mrf.mxu0
    %1296 = vdwg.mxu0
    %v1297 = vadd.f32 %v1294, %v83
    %v1298 = vmul.f32 %v1297, 0.5
    %v1299 = vtanh.pop %v1298
    %v1300 = vadd.f32 %v1299, 1.0
    %v1301 = vmul.f32 %v1300, 0.5
    %1303 = vrot.lane.b32.xlu0 %v1297, 32
    %v1304 = vpop.permute.xlu0 %1303
    %v1306 = vmul.f32 %v1301, %v1304
    %1308 = vrot.lane.b32.xlu0 %v1306, 64
    %v1309 = vpop.permute.xlu0 %1308
    %v1311 = vadd.f32 %v1297, %v1309
    %v1312 = vtanh.pop %v1311
    %v1313 = vsub.f32 1.0, %v1301
    %1315 = vrot.lane.b32.xlu0 %v1312, 96
    %v1316 = vpop.permute.xlu0 %1315
    %v1318 = vmul.f32 %v1313, %v1316
    %v1319 = vmul.f32 %v1301, %v1230
    %v1320 = vadd.f32 %v1318, %v1319
    %v1321 = vpack.c.bf16 %v1274, %v1274
    %1323 = vrot.lane.b32.xlu0 %v1321, 96
    %v1324 = vpop.permute.xlu0 %1323
    %v1326 = vsel %vm175, %v1324, 0
    %1328 = vmatpush.bf16.msra.mxu0 0
    %1329 = vmatpush.bf16.msra.mxu0 0
    %1330 = vmatpush.bf16.msra.mxu0 0
    %1331 = vmatpush.bf16.msra.mxu0 0
    %1332 = vmatpush.bf16.msra.mxu0 0
    %1333 = vmatpush.bf16.msra.mxu0 0
    %1334 = vmatpush.bf16.msra.mxu0 %v938
    %1335 = vmatpush.bf16.msra.mxu0 %v937
    %1336 = vmatmul.bf16.gmra.mxu0 %v1326
    %v1337 = vpop.f32.mrf.mxu0
    %v1338 = vadd.f32 0.0, %v1337
    %v1339 = vpop.f32.mrf.mxu0
    %1340 = vdwg.mxu0
    %v1341 = vadd.f32 %v1338, %v78
    %v1342 = vmul.f32 %v1341, 0.5
    %v1343 = vtanh.pop %v1342
    %v1344 = vadd.f32 %v1343, 1.0
    %v1345 = vmul.f32 %v1344, 0.5
    %1347 = vrot.lane.b32.xlu0 %v1341, 32
    %v1348 = vpop.permute.xlu0 %1347
    %v1350 = vmul.f32 %v1345, %v1348
    %1352 = vrot.lane.b32.xlu0 %v1350, 64
    %v1353 = vpop.permute.xlu0 %1352
    %v1355 = vadd.f32 %v1341, %v1353
    %v1356 = vtanh.pop %v1355
    %v1357 = vsub.f32 1.0, %v1345
    %1359 = vrot.lane.b32.xlu0 %v1356, 96
    %v1360 = vpop.permute.xlu0 %1359
    %v1362 = vmul.f32 %v1357, %v1360
    %v1363 = vmul.f32 %v1345, %v1274
    %v1364 = vadd.f32 %v1362, %v1363
    %1366 = vrot.lane.b32.xlu0 %v1364, 96
    %v1367 = vpop.permute.xlu0 %1366
    %v1369 = vsel %vm175, %v1367, %v1320
    %v1370 = vpack.c.bf16 %v1369, %v1369
    %v1372 = vsel %vm247, %v1370, 0
    %1374 = vmatpush.bf16.msra.mxu0 0
    %1375 = vmatpush.bf16.msra.mxu0 0
    %1376 = vmatpush.bf16.msra.mxu0 0
    %1377 = vmatpush.bf16.msra.mxu0 0
    %1378 = vmatpush.bf16.msra.mxu0 %v1006
    %1379 = vmatpush.bf16.msra.mxu0 %v1005
    %1380 = vmatpush.bf16.msra.mxu0 %v1004
    %1381 = vmatpush.bf16.msra.mxu0 %v1003
    %1382 = vmatmul.bf16.gmra.mxu0 %v1372
    %v1383 = vpop.f32.mrf.mxu0
    %v1384 = vadd.f32 0.0, %v1383
    %v1385 = vpop.f32.mrf.mxu0
    %1386 = vdwg.mxu0
    %v1387 = vadd.f32 %v1384, %v83
    %v1388 = vmul.f32 %v1387, 0.5
    %v1389 = vtanh.pop %v1388
    %v1390 = vadd.f32 %v1389, 1.0
    %v1391 = vmul.f32 %v1390, 0.5
    %1393 = vrot.lane.b32.xlu0 %v1387, 32
    %v1394 = vpop.permute.xlu0 %1393
    %v1396 = vmul.f32 %v1391, %v1394
    %1398 = vrot.lane.b32.xlu0 %v1396, 64
    %v1399 = vpop.permute.xlu0 %1398
    %v1401 = vadd.f32 %v1387, %v1399
    %v1402 = vtanh.pop %v1401
    %v1403 = vsub.f32 1.0, %v1391
    %1405 = vrot.lane.b32.xlu0 %v1402, 96
    %v1406 = vpop.permute.xlu0 %1405
    %v1408 = vmul.f32 %v1403, %v1406
    %v1409 = vmul.f32 %v1391, %v1320
    %v1410 = vadd.f32 %v1408, %v1409
    %v1411 = vpack.c.bf16 %v1364, %v1364
    %1413 = vrot.lane.b32.xlu0 %v1411, 96
    %v1414 = vpop.permute.xlu0 %1413
    %v1416 = vsel %vm175, %v1414, 0
    %1418 = vmatpush.bf16.msra.mxu0 0
    %1419 = vmatpush.bf16.msra.mxu0 0
    %1420 = vmatpush.bf16.msra.mxu0 0
    %1421 = vmatpush.bf16.msra.mxu0 0
    %1422 = vmatpush.bf16.msra.mxu0 0
    %1423 = vmatpush.bf16.msra.mxu0 0
    %1424 = vmatpush.bf16.msra.mxu0 %v938
    %1425 = vmatpush.bf16.msra.mxu0 %v937
    %1426 = vmatmul.bf16.gmra.mxu0 %v1416
    %v1427 = vpop.f32.mrf.mxu0
    %v1428 = vadd.f32 0.0, %v1427
    %v1429 = vpop.f32.mrf.mxu0
    %1430 = vdwg.mxu0
    %v1431 = vadd.f32 %v1428, %v78
    %v1432 = vmul.f32 %v1431, 0.5
    %v1433 = vtanh.pop %v1432
    %v1434 = vadd.f32 %v1433, 1.0
    %v1435 = vmul.f32 %v1434, 0.5
    %1437 = vrot.lane.b32.xlu0 %v1431, 32
    %v1438 = vpop.permute.xlu0 %1437
    %v1440 = vmul.f32 %v1435, %v1438
    %1442 = vrot.lane.b32.xlu0 %v1440, 64
    %v1443 = vpop.permute.xlu0 %1442
    %v1445 = vadd.f32 %v1431, %v1443
    %v1446 = vtanh.pop %v1445
    %v1447 = vsub.f32 1.0, %v1435
    %1449 = vrot.lane.b32.xlu0 %v1446, 96
    %v1450 = vpop.permute.xlu0 %1449
    %v1452 = vmul.f32 %v1447, %v1450
    %v1453 = vmul.f32 %v1435, %v1364
    %v1454 = vadd.f32 %v1452, %v1453
    %1456 = vrot.lane.b32.xlu0 %v1454, 96
    %v1457 = vpop.permute.xlu0 %1456
    %v1459 = vsel %vm175, %v1457, %v1410
    %v1460 = vpack.c.bf16 %v1459, %v1459
    %v1462 = vsel %vm247, %v1460, 0
    %1464 = vmatpush.bf16.msra.mxu0 0
    %1465 = vmatpush.bf16.msra.mxu0 0
    %1466 = vmatpush.bf16.msra.mxu0 0
    %1467 = vmatpush.bf16.msra.mxu0 0
    %1468 = vmatpush.bf16.msra.mxu0 %v1006
    %1469 = vmatpush.bf16.msra.mxu0 %v1005
    %1470 = vmatpush.bf16.msra.mxu0 %v1004
    %1471 = vmatpush.bf16.msra.mxu0 %v1003
    %1472 = vmatmul.bf16.gmra.mxu0 %v1462
    %v1473 = vpop.f32.mrf.mxu0
    %v1474 = vadd.f32 0.0, %v1473
    %v1475 = vpop.f32.mrf.mxu0
    %1476 = vdwg.mxu0
    %v1477 = vadd.f32 %v1474, %v83
    %v1478 = vmul.f32 %v1477, 0.5
    %v1479 = vtanh.pop %v1478
    %v1480 = vadd.f32 %v1479, 1.0
    %v1481 = vmul.f32 %v1480, 0.5
    %1483 = vrot.lane.b32.xlu0 %v1477, 32
    %v1484 = vpop.permute.xlu0 %1483
    %v1486 = vmul.f32 %v1481, %v1484
    %1488 = vrot.lane.b32.xlu0 %v1486, 64
    %v1489 = vpop.permute.xlu0 %1488
    %v1491 = vadd.f32 %v1477, %v1489
    %v1492 = vtanh.pop %v1491
    %v1493 = vsub.f32 1.0, %v1481
    %1495 = vrot.lane.b32.xlu0 %v1492, 96
    %v1496 = vpop.permute.xlu0 %1495
    %v1498 = vmul.f32 %v1493, %v1496
    %v1499 = vmul.f32 %v1481, %v1410
    %v1500 = vadd.f32 %v1498, %v1499
    %v1501 = vpack.c.bf16 %v1454, %v1454
    %1503 = vrot.lane.b32.xlu0 %v1501, 96
    %v1504 = vpop.permute.xlu0 %1503
    %v1506 = vsel %vm175, %v1504, 0
    %1508 = vmatpush.bf16.msra.mxu0 0
    %1509 = vmatpush.bf16.msra.mxu0 0
    %1510 = vmatpush.bf16.msra.mxu0 0
    %1511 = vmatpush.bf16.msra.mxu0 0
    %1512 = vmatpush.bf16.msra.mxu0 0
    %1513 = vmatpush.bf16.msra.mxu0 0
    %1514 = vmatpush.bf16.msra.mxu0 %v938
    %1515 = vmatpush.bf16.msra.mxu0 %v937
    %1516 = vmatmul.bf16.gmra.mxu0 %v1506
    %v1517 = vpop.f32.mrf.mxu0
    %v1518 = vadd.f32 0.0, %v1517
    %v1519 = vpop.f32.mrf.mxu0
    %1520 = vdwg.mxu0
    %v1521 = vadd.f32 %v1518, %v78
    %v1522 = vmul.f32 %v1521, 0.5
    %v1523 = vtanh.pop %v1522
    %v1524 = vadd.f32 %v1523, 1.0
    %v1525 = vmul.f32 %v1524, 0.5
    %1527 = vrot.lane.b32.xlu0 %v1521, 32
    %v1528 = vpop.permute.xlu0 %1527
    %v1530 = vmul.f32 %v1525, %v1528
    %1532 = vrot.lane.b32.xlu0 %v1530, 64
    %v1533 = vpop.permute.xlu0 %1532
    %v1535 = vadd.f32 %v1521, %v1533
    %v1536 = vtanh.pop %v1535
    %v1537 = vsub.f32 1.0, %v1525
    %1539 = vrot.lane.b32.xlu0 %v1536, 96
    %v1540 = vpop.permute.xlu0 %1539
    %v1542 = vmul.f32 %v1537, %v1540
    %v1543 = vmul.f32 %v1525, %v1454
    %v1544 = vadd.f32 %v1542, %v1543
    %1546 = vrot.lane.b32.xlu0 %v1544, 96
    %v1547 = vpop.permute.xlu0 %1546
    %v1549 = vsel %vm175, %v1547, %v1500
    %v1550 = vpack.c.bf16 %v1549, %v1549
    %v1552 = vsel %vm247, %v1550, 0
    %1554 = vmatpush.bf16.msra.mxu0 0
    %1555 = vmatpush.bf16.msra.mxu0 0
    %1556 = vmatpush.bf16.msra.mxu0 0
    %1557 = vmatpush.bf16.msra.mxu0 0
    %1558 = vmatpush.bf16.msra.mxu0 %v1006
    %1559 = vmatpush.bf16.msra.mxu0 %v1005
    %1560 = vmatpush.bf16.msra.mxu0 %v1004
    %1561 = vmatpush.bf16.msra.mxu0 %v1003
    %1562 = vmatmul.bf16.gmra.mxu0 %v1552
    %v1563 = vpop.f32.mrf.mxu0
    %v1564 = vadd.f32 0.0, %v1563
    %v1565 = vpop.f32.mrf.mxu0
    %1566 = vdwg.mxu0
    %v1567 = vadd.f32 %v1564, %v83
    %v1568 = vmul.f32 %v1567, 0.5
    %v1569 = vtanh.pop %v1568
    %v1570 = vadd.f32 %v1569, 1.0
    %v1571 = vmul.f32 %v1570, 0.5
    %1573 = vrot.lane.b32.xlu0 %v1567, 32
    %v1574 = vpop.permute.xlu0 %1573
    %v1576 = vmul.f32 %v1571, %v1574
    %1578 = vrot.lane.b32.xlu0 %v1576, 64
    %v1579 = vpop.permute.xlu0 %1578
    %v1581 = vadd.f32 %v1567, %v1579
    %v1582 = vtanh.pop %v1581
    %v1583 = vsub.f32 1.0, %v1571
    %1585 = vrot.lane.b32.xlu0 %v1582, 96
    %v1586 = vpop.permute.xlu0 %1585
    %v1588 = vmul.f32 %v1583, %v1586
    %v1589 = vmul.f32 %v1571, %v1500
    %v1590 = vadd.f32 %v1588, %v1589
    %v1591 = vpack.c.bf16 %v1544, %v1544
    %1593 = vrot.lane.b32.xlu0 %v1591, 96
    %v1594 = vpop.permute.xlu0 %1593
    %v1596 = vsel %vm175, %v1594, 0
    %1598 = vmatpush.bf16.msra.mxu0 0
    %1599 = vmatpush.bf16.msra.mxu0 0
    %1600 = vmatpush.bf16.msra.mxu0 0
    %1601 = vmatpush.bf16.msra.mxu0 0
    %1602 = vmatpush.bf16.msra.mxu0 0
    %1603 = vmatpush.bf16.msra.mxu0 0
    %1604 = vmatpush.bf16.msra.mxu0 %v938
    %1605 = vmatpush.bf16.msra.mxu0 %v937
    %1606 = vmatmul.bf16.gmra.mxu0 %v1596
    %v1607 = vpop.f32.mrf.mxu0
    %v1608 = vadd.f32 0.0, %v1607
    %v1609 = vpop.f32.mrf.mxu0
    %1610 = vdwg.mxu0
    %v1611 = vadd.f32 %v1608, %v78
    %v1612 = vmul.f32 %v1611, 0.5
    %v1613 = vtanh.pop %v1612
    %v1614 = vadd.f32 %v1613, 1.0
    %v1615 = vmul.f32 %v1614, 0.5
    %1617 = vrot.lane.b32.xlu0 %v1611, 32
    %v1618 = vpop.permute.xlu0 %1617
    %v1620 = vmul.f32 %v1615, %v1618
    %1622 = vrot.lane.b32.xlu0 %v1620, 64
    %v1623 = vpop.permute.xlu0 %1622
    %v1625 = vadd.f32 %v1611, %v1623
    %v1626 = vtanh.pop %v1625
    %v1627 = vsub.f32 1.0, %v1615
    %1629 = vrot.lane.b32.xlu0 %v1626, 96
    %v1630 = vpop.permute.xlu0 %1629
    %v1632 = vmul.f32 %v1627, %v1630
    %v1633 = vmul.f32 %v1615, %v1544
    %v1634 = vadd.f32 %v1632, %v1633
    %1636 = vrot.lane.b32.xlu0 %v1634, 96
    %v1637 = vpop.permute.xlu0 %1636
    %v1639 = vsel %vm175, %v1637, %v1590
    %v1640 = vpack.c.bf16 %v1639, %v1639
    %v1642 = vsel %vm247, %v1640, 0
    %1644 = vmatpush.bf16.msra.mxu0 0
    %1645 = vmatpush.bf16.msra.mxu0 0
    %1646 = vmatpush.bf16.msra.mxu0 0
    %1647 = vmatpush.bf16.msra.mxu0 0
    %1648 = vmatpush.bf16.msra.mxu0 %v1006
    %1649 = vmatpush.bf16.msra.mxu0 %v1005
    %1650 = vmatpush.bf16.msra.mxu0 %v1004
    %1651 = vmatpush.bf16.msra.mxu0 %v1003
    %1652 = vmatmul.bf16.gmra.mxu0 %v1642
    %v1653 = vpop.f32.mrf.mxu0
    %v1654 = vadd.f32 0.0, %v1653
    %v1655 = vpop.f32.mrf.mxu0
    %1656 = vdwg.mxu0
    %v1657 = vadd.f32 %v1654, %v83
    %v1658 = vmul.f32 %v1657, 0.5
    %v1659 = vtanh.pop %v1658
    %v1660 = vadd.f32 %v1659, 1.0
    %v1661 = vmul.f32 %v1660, 0.5
    %1663 = vrot.lane.b32.xlu0 %v1657, 32
    %v1664 = vpop.permute.xlu0 %1663
    %v1666 = vmul.f32 %v1661, %v1664
    %1668 = vrot.lane.b32.xlu0 %v1666, 64
    %v1669 = vpop.permute.xlu0 %1668
    %v1671 = vadd.f32 %v1657, %v1669
    %v1672 = vtanh.pop %v1671
    %v1673 = vsub.f32 1.0, %v1661
    %1675 = vrot.lane.b32.xlu0 %v1672, 96
    %v1676 = vpop.permute.xlu0 %1675
    %v1678 = vmul.f32 %v1673, %v1676
    %v1679 = vmul.f32 %v1661, %v1590
    %v1680 = vadd.f32 %v1678, %v1679
    %v1682 = vrot.slane %v1140, 6
    %v1685 = vrot.slane %v1230, 4
    %v1688 = vrot.slane %v1320, 2
    %v1691 = vrot.slane %v1500, 6
    %v1694 = vrot.slane %v1590, 4
    %v1697 = vrot.slane %v1680, 2
    %vm1699 = vcmask 1041408
    %v1700 = vsel %vm1699, %v1050, %v1682
    %vm1701 = vcmask 1043456
    %v1702 = vsel %vm1701, %v1700, %v1685
    %vm1703 = vcmask 1045504
    %v1704 = vsel %vm1703, %v1702, %v1688
    %v1705 = vsel %vm1699, %v1410, %v1691
    %v1706 = vsel %vm1701, %v1705, %v1694
    %v1707 = vsel %vm1703, %v1706, %v1697
    %v1708 = vpack.c.bf16 %v1707, %v1704
    %1710 = vrot.lane.b32.xlu0 %v1708, 96
    %v1711 = vpop.permute.xlu0 %1710
    %v1716 = vunpack.c.l.b16 %v62
    %v1717 = vunpack.c.l.b16 %v63
    %v1718 = vunpack.c.l.b16 %v64
    %v1719 = vunpack.c.l.b16 %v65
    %v1720 = vpack.c.b16 %v1717, %v1716
    %v1721 = vpack.c.b16 %v1719, %v1718
    %v1725 = vsel %vm175, %v1711, 0
    %1727 = vmatpush.bf16.msra.mxu0 0
    %1728 = vmatpush.bf16.msra.mxu0 0
    %1729 = vmatpush.bf16.msra.mxu0 0
    %1730 = vmatpush.bf16.msra.mxu0 0
    %1731 = vmatpush.bf16.msra.mxu0 0
    %1732 = vmatpush.bf16.msra.mxu0 0
    %1733 = vmatpush.bf16.msra.mxu0 %v1721
    %1734 = vmatpush.bf16.msra.mxu0 %v1720
    %1735 = vmatmul.bf16.gmra.mxu0 %v1725
    %v1736 = vpop.f32.mrf.mxu0
    %v1737 = vadd.f32 0.0, %v1736
    %v1738 = vpop.f32.mrf.mxu0
    %v1739 = vadd.f32 0.0, %v1738
    %1740 = vdwg.mxu0
    %v1742 = vperm.slane %v86, 0
    %v1744 = vadd.f32 %v1737, %v1742
    %v1745 = vadd.f32 %v1739, %v1742
    %vm1746 = vcmask 15360
    %1747 = vst.msk [vmem:[%s3] sm:$0xff] %vm1746, %v1744
    %1748 = vst.msk [vmem:[%s3 + $0x8] sm:$0xff] %vm1746, %v1745
    // Predicated region
    $region18: #{tpu_custom_call.1} parent=1 // pred_check
      _
    $region19: #{tpu_custom_call.1} parent=1 // pred_check_branch
      %1750 = sbr.rel (0) target = $region21
    $region20: #{tpu_custom_call.1} parent=1 // pred_region
      _
    $region21: #{tpu_custom_call.1} parent=1 // pred_fallthru
      _
    // Predicated region
    $region22: #{tpu_custom_call.1} parent=1 // pred_check
      _
    $region23: #{tpu_custom_call.1} parent=1 // pred_check_branch
      %1752 = sbr.rel (0) target = $region25
    $region24: #{tpu_custom_call.1} parent=1 // pred_region
      _
    $region25: #{tpu_custom_call.1} parent=1 // pred_fallthru
      _
    %1753 = vsyncpa [#allocation3], 1

</llo_original>
